<compile_context>
chip_gen: v6e
topology: v6e:2x2x1
jax: 0.10.0
libtpu: 0.0.40
codegen_flags: <defaults>
</compile_context>

<pallas_src>
import jax
import jax.numpy as jnp
from jax.experimental import pallas as pl
from jax.experimental.pallas import tpu as pltpu


def _round_up(n, m):
    return ((n + m - 1) // m) * m


def _padded_bytes(rows, cols, itemsize):
    """VMEM footprint of a (rows, cols) buffer after (sublane, lane) tiling."""
    sub = {4: 8, 2: 16, 1: 32}.get(itemsize, 8)
    return _round_up(max(rows, 1), sub) * _round_up(max(cols, 1), 128) * itemsize


def _vmem_limit_bytes(tu, tx, hh, out_pad, n_x_pad, n_hidden, normalize,
                      x_resident):
    """Explicit scoped-VMEM budget with lane/sublane padding accounted for."""
    need = 2 * _padded_bytes(1, tx, 4)                       # uinv tile (x2 bufs)
    xw_rows = n_x_pad if x_resident else tx
    need += 2 * _padded_bytes(xw_rows, hh, 2)                # xw (resident/streamed)
    need += 2 * _padded_bytes(tu, out_pad, 4)                # output block
    need += _padded_bytes(tu, hh, 4)                         # f32 acc scratch
    need += 2 * _padded_bytes(1, hh, 4)                      # bias row
    for _ in range(n_hidden):
        need += 2 * (_padded_bytes(hh, hh, 2) + _padded_bytes(1, hh, 4))
        if normalize:
            need += 4 * _padded_bytes(1, hh, 4)
    need += 2 * (_padded_bytes(hh, out_pad, 2) + _padded_bytes(1, out_pad, 4))
    # in-kernel one-hot generation intermediates (i32 iota, mask, bf16 one-hot)
    need += _padded_bytes(tu, tx, 4) + 2 * _padded_bytes(tu, tx, 2)
    return int(min(max(2 * need, 16 << 20), 40 << 20))


def _make_edge_aggr_kernel(n_hidden, normalize, activation, tile_x, x_resident):
    """Fused (in-register one-hot segment-sum) + GraphConv + MLP kernel."""

    def layer_norm(h, gamma, beta, eps=1e-5):
        mu = jnp.mean(h, axis=-1, keepdims=True)
        var = jnp.mean((h - mu) ** 2, axis=-1, keepdims=True)
        return (h - mu) * jax.lax.rsqrt(var + eps) * gamma + beta

    def kernel(*refs):
        it = iter(refs)
        uinv_ref = next(it)     # (1, TX) int32      segment id per edge col (-1=pad)
        xw_ref = next(it)       # (n_x_pad, Hh) bf16 (resident) or (TX, Hh) streamed
        bias_ref = next(it)     # (1, Hh) f32        emb @ w_self + b_gc (root term)
        mlp_refs = []
        for _ in range(n_hidden):
            w = next(it)
            b = next(it)
            g = next(it) if normalize else None
            be = next(it) if normalize else None
            mlp_refs.append((w, b, g, be))
        wf_ref = next(it)       # (Hh, out_pad) bf16, lane-dense (zero-padded cols)
        bf_ref = next(it)       # (1, out_pad) f32
        out_ref = next(it)      # (TU, out_pad) f32
        acc_ref = next(it)      # scratch (TU, Hh) f32 — lane-dense accumulator

        i = pl.program_id(0)
        k = pl.program_id(1)
        tu = acc_ref.shape[0]

        @pl.when(k == 0)
        def _():
            acc_ref[...] = jnp.zeros_like(acc_ref)

        # Build the (TU, TX) one-hot tile in-register from the segment ids:
        # row r matches column j iff uinv[j] == i*TU + r.  Padded columns carry
        # uinv == -1 and never match -> exact zero contribution.
        seg = uinv_ref[...] - i * tu                           # (1, TX) int32
        rows = jax.lax.broadcasted_iota(jnp.int32, (tu, tile_x), 0)
        onehot = (rows == seg).astype(jnp.bfloat16)            # (TU, TX) bf16

        if x_resident:
            start = pl.multiple_of(k * tile_x, tile_x)
            xw_tile = xw_ref[pl.ds(start, tile_x), :]
        else:
            xw_tile = xw_ref[...]

        # Dominant matmul: one-hot segment-sum fused with the (pre-applied)
        # neighbour projection, accumulated at lane-dense width Hh in f32.
        acc_ref[...] += jnp.dot(onehot, xw_tile,
                                preferred_element_type=jnp.float32)

        @pl.when(k == pl.num_programs(1) - 1)
        def _():
            h = acc_ref[...] + bias_ref[...]
            for (w, b, g, be) in mlp_refs:
                h = jnp.dot(h.astype(jnp.bfloat16), w[...],
                            preferred_element_type=jnp.float32) + b[...]
                if normalize:
                    h = layer_norm(h, g[...], be[...])
                h = activation(h)
            out_ref[...] = jnp.dot(h.astype(jnp.bfloat16), wf_ref[...],
                                   preferred_element_type=jnp.float32) + bf_ref[...]

    return kernel


def init_params(key, hidden_dim, num_heads, n_mlp_layers, normalize=True):
    Hh = hidden_dim * num_heads
    ks = iter(jax.random.split(key, 4 + 2 * max(n_mlp_layers, 1)))

    def dense(k, fan_in, fan_out):
        return jax.random.normal(k, (fan_in, fan_out), jnp.float32) / jnp.sqrt(
            jnp.float32(fan_in))

    params = {
        "emb": jax.random.normal(next(ks), (1, hidden_dim), jnp.float32),
        "w_neigh": dense(next(ks), hidden_dim, Hh),
        "w_self": dense(next(ks), hidden_dim, Hh),
        "b_gc": jnp.zeros((1, Hh), jnp.float32),
        "mlp_hidden": [],
    }
    for _ in range(max(n_mlp_layers - 1, 0)):
        layer = {"w": dense(next(ks), Hh, Hh), "b": jnp.zeros((1, Hh), jnp.float32)}
        if normalize:
            layer["g"] = jnp.ones((1, Hh), jnp.float32)
            layer["beta"] = jnp.zeros((1, Hh), jnp.float32)
        params["mlp_hidden"].append(layer)
    params["wf"] = dense(next(ks), Hh, hidden_dim)
    params["bf"] = jnp.zeros((1, hidden_dim), jnp.float32)
    return params


def _edge_aggr_padded(params, x, row, col, *, c, num_heads, n_mlp_layers,
                      normalize, activation, n_u_max, tile_u, tile_x):
    """Fully jit-able padded forward: returns (u_padded, n_valid, y3_padded)."""
    f32, bf16 = jnp.float32, jnp.bfloat16
    n_x = int(x.shape[0])
    hidden_dim = int(x.shape[1])
    Hh = hidden_dim * num_heads
    n_hidden = len(params["mlp_hidden"])
    assert n_hidden == max(n_mlp_layers - 1, 0)

    # ---- static-size unique (jit-able); padded slots get u = -1 ------------
    flattened = (row * c + col).astype(jnp.int32)
    u, uinv = jnp.unique(flattened, return_inverse=True, size=n_u_max,
                         fill_value=-1)
    n_valid = jnp.sum(u >= 0).astype(jnp.int32)

    # ---- tiling (all sizes static, derived from n_u_max / n_x) -------------
    if tile_u is None:
        base = _round_up(max(n_u_max, 8), 8)
        TU = min(128, base)
        # ensure >= 2 parallel i tiles when possible so the "parallel" axis can
        # be sharded across both TensorCores (v7x megacore).
        if base > 8 and _round_up(base, TU) // TU < 2:
            TU = max(8, _round_up((base + 1) // 2, 8))
    else:
        TU = max(8, _round_up(int(tile_u), 8))
    n_u_pad = _round_up(max(n_u_max, 8), TU)

    n_x_128 = _round_up(max(n_x, 128), 128)
    TX = min(2048, n_x_128) if tile_x is None else max(128, _round_up(int(tile_x), 128))
    TX = min(TX, n_x_128)
    n_x_pad = _round_up(n_x_128, TX)

    x_resident = (n_x_pad * Hh * 2) <= (8 << 20)
    out_pad = _round_up(hidden_dim, 128)   # lane-dense output slab

    # ---- kernel operands ----------------------------------------------------
    # Pre-project x by w_neigh once (f32 matmul), cast to bf16 for the MXU.
    # Accumulating at width Hh costs the same MXU passes as width hidden_dim
    # (N <= MXU array width) and makes the accumulator lane-dense.
    # TODO(synk): for Hh > 256, accumulate at width hidden_dim and apply w_neigh
    # in the epilogue instead (fewer MXU passes in that regime).
    xw = jnp.dot(x.astype(f32), params["w_neigh"].astype(f32))
    xw_pad = jnp.zeros((n_x_pad, Hh), bf16).at[:n_x].set(xw.astype(bf16))

    uinv_pad = jnp.full((1, n_x_pad), -1, jnp.int32).at[0, :n_x].set(
        uinv.astype(jnp.int32))

    # Parameter-only precompute: root/self term + GraphConv bias -> one row.
    bias_row = (jnp.dot(params["emb"].astype(f32), params["w_self"].astype(f32))
                + params["b_gc"].astype(f32))

    wf_pad = jnp.zeros((Hh, out_pad), bf16).at[:, :hidden_dim].set(
        params["wf"].astype(bf16))
    bf_pad = jnp.zeros((1, out_pad), f32).at[:, :hidden_dim].set(
        params["bf"].astype(f32))

    inputs = [uinv_pad, xw_pad, bias_row]
    for layer in params["mlp_hidden"]:
        inputs += [layer["w"].astype(bf16), layer["b"].astype(f32)]
        if normalize:
            inputs += [layer["g"].astype(f32), layer["beta"].astype(f32)]
    inputs += [wf_pad, bf_pad]

    in_specs = [pl.BlockSpec((1, TX), lambda i, k: (0, k))]          # uinv tile
    if x_resident:
        # xw stays resident in VMEM across the whole grid; sliced in-kernel.
        in_specs.append(pl.BlockSpec((n_x_pad, Hh), lambda i, k: (0, 0)))
    else:
        # TODO(synk): non-resident fallback re-streams xw once per i tile.
        in_specs.append(pl.BlockSpec((TX, Hh), lambda i, k: (k, 0)))
    for a in inputs[2:]:                                             # weights
        in_specs.append(pl.BlockSpec(a.shape, lambda i, k: (0, 0)))

    out_spec = pl.BlockSpec((TU, out_pad), lambda i, k: (i, 0))
    grid = (n_u_pad // TU, n_x_pad // TX)

    kernel = _make_edge_aggr_kernel(n_hidden, normalize, activation, TX,
                                    x_resident)
    vmem_limit = _vmem_limit_bytes(TU, TX, Hh, out_pad, n_x_pad, n_hidden,
                                   normalize, x_resident)

    y3_pad = pl.pallas_call(
        kernel,
        out_shape=jax.ShapeDtypeStruct((n_u_pad, out_pad), f32),
        grid_spec=pltpu.PrefetchScalarGridSpec(
            num_scalar_prefetch=0,
            grid=grid,
            in_specs=in_specs,
            out_specs=out_spec,
            scratch_shapes=[pltpu.VMEM((TU, Hh), f32)]),
        compiler_params=pltpu.CompilerParams(
            dimension_semantics=("parallel", "arbitrary"),
            vmem_limit_bytes=vmem_limit),
    )(*inputs)

    return u, n_valid, y3_pad[:, :hidden_dim]


_edge_aggr_padded_jit = jax.jit(
    _edge_aggr_padded,
    static_argnames=("c", "num_heads", "n_mlp_layers", "normalize",
                     "activation", "n_u_max", "tile_u", "tile_x"))


def edge_aggr_forward(params, x, row, col, c, *, num_heads, n_mlp_layers,
                      normalize=True, activation=jax.nn.relu,
                      n_u_max=None, tile_u=None, tile_x=None):
    if n_u_max is None:
        n_u_max = int(x.shape[0])   # max possible unique count
    u_pad, n_valid, y3_pad = _edge_aggr_padded_jit(
        params, x, row, col, c=int(c), num_heads=num_heads,
        n_mlp_layers=n_mlp_layers, normalize=normalize, activation=activation,
        n_u_max=int(n_u_max), tile_u=tile_u, tile_x=tile_x)
    # TODO(synk): torch.unique has a data-dependent output size; one host sync
    # on the scalar count is unavoidable for the final dynamic slice.
    n_u = int(n_valid)
    u = u_pad[:n_u]
    edge_index = jnp.stack([u // c, u % c])
    y3 = y3_pad[:n_u]
    return edge_index, y3


def edge_aggr_reference(params, x, row, col, c, *, num_heads, n_mlp_layers,
                        normalize=True, activation=jax.nn.relu):
    """Pure-JAX f32 reference (eager; data-dependent unique)."""
    del num_heads, n_mlp_layers
    flattened = row * c + col
    u, uinv = jnp.unique(flattened, return_inverse=True)
    agg = jnp.zeros((u.shape[0], x.shape[1]), jnp.float32).at[uinv].add(x)
    h = agg @ params["w_neigh"] + params["emb"] @ params["w_self"] + params["b_gc"]
    for layer in params["mlp_hidden"]:
        h = h @ layer["w"] + layer["b"]
        if normalize:
            mu = h.mean(-1, keepdims=True)
            var = ((h - mu) ** 2).mean(-1, keepdims=True)
            h = (h - mu) * jax.lax.rsqrt(var + 1e-5) * layer["g"] + layer["beta"]
        h = activation(h)
    y3 = h @ params["wf"] + params["bf"]
    edge_index = jnp.stack([u // c, u % c])
    return edge_index, y3


if __name__ == "__main__":
    hidden_dim, num_heads, n_mlp_layers = 32, 4, 3
    normalize = True
    num_edges = 300
    c = 10  # number of columns in the (row, col) index pairs

    key = jax.random.PRNGKey(0)
    kx, kr, kc = jax.random.split(key, 3)
    x = jax.random.normal(kx, (num_edges, hidden_dim), jnp.float32)
    row = jax.random.randint(kr, (num_edges,), 0, c, dtype=jnp.int32)
    col = jax.random.randint(kc, (num_edges,), 0, c, dtype=jnp.int32)

    params = init_params(jax.random.PRNGKey(42), hidden_dim, num_heads,
                         n_mlp_layers, normalize)

    # tile_x=128 just so the small demo exercises the k-reduction axis too.
    edge_index, y3 = edge_aggr_forward(
        params, x, row, col, c,
        num_heads=num_heads, n_mlp_layers=n_mlp_layers,
        normalize=normalize, activation=jax.nn.relu, tile_x=128)
    jax.block_until_ready((edge_index, y3))

    edge_index_ref, y3_ref = edge_aggr_reference(
        params, x, row, col, c,
        num_heads=num_heads, n_mlp_layers=n_mlp_layers,
        normalize=normalize, activation=jax.nn.relu)

    assert edge_index.shape == (2, y3.shape[0])
    assert y3.shape == y3_ref.shape and y3.shape[1] == hidden_dim
    assert bool(jnp.all(edge_index == edge_index_ref))
    assert bool(jnp.all(jnp.isfinite(y3)))
    # bf16 MXU operands (xw / epilogue casts) vs f32 reference -> loose tol.
    assert bool(jnp.allclose(y3, y3_ref, rtol=5e-2, atol=5e-2)), float(
        jnp.max(jnp.abs(y3 - y3_ref)))
    print("KERNEL_OK")
</pallas_src>

<mosaic_0001>
module attributes {stable_mosaic.version = 11 : i64} {
  func.func @kernel(%arg0: i32, %arg1: i32, %arg2: memref<1x128xi32, #tpu.memory_space<vmem>>, %arg3: memref<384x128xbf16, #tpu.memory_space<vmem>>, %arg4: memref<1x128xf32, #tpu.memory_space<vmem>>, %arg5: memref<128x128xbf16, #tpu.memory_space<vmem>>, %arg6: memref<1x128xf32, #tpu.memory_space<vmem>>, %arg7: memref<1x128xf32, #tpu.memory_space<vmem>>, %arg8: memref<1x128xf32, #tpu.memory_space<vmem>>, %arg9: memref<128x128xbf16, #tpu.memory_space<vmem>>, %arg10: memref<1x128xf32, #tpu.memory_space<vmem>>, %arg11: memref<1x128xf32, #tpu.memory_space<vmem>>, %arg12: memref<1x128xf32, #tpu.memory_space<vmem>>, %arg13: memref<128x128xbf16, #tpu.memory_space<vmem>>, %arg14: memref<1x128xf32, #tpu.memory_space<vmem>>, %arg15: memref<128x128xf32, #tpu.memory_space<vmem>>, %arg16: memref<128x128xf32, #tpu.memory_space<vmem>>) attributes {dimension_semantics = [#tpu.dimension_semantics<parallel>, #tpu.dimension_semantics<arbitrary>], iteration_bounds = array<i64: 3, 3>, scalar_prefetch = 0 : i64, scratch_operands = 1 : i64, tpu.core_type = #tpu.core_type<tc>, window_params = [{transform_indices = @transform_0, window_bounds = array<i64: 1, 128>}, {pipeline_mode = #tpu.pipeline_mode<synchronous>, transform_indices = @transform_1, window_bounds = array<i64: 384, 128>}, {pipeline_mode = #tpu.pipeline_mode<synchronous>, transform_indices = @transform_2, window_bounds = array<i64: 1, 128>}, {pipeline_mode = #tpu.pipeline_mode<synchronous>, transform_indices = @transform_3, window_bounds = array<i64: 128, 128>}, {pipeline_mode = #tpu.pipeline_mode<synchronous>, transform_indices = @transform_4, window_bounds = array<i64: 1, 128>}, {pipeline_mode = #tpu.pipeline_mode<synchronous>, transform_indices = @transform_5, window_bounds = array<i64: 1, 128>}, {pipeline_mode = #tpu.pipeline_mode<synchronous>, transform_indices = @transform_6, window_bounds = array<i64: 1, 128>}, {pipeline_mode = #tpu.pipeline_mode<synchronous>, transform_indices = @transform_7, window_bounds = array<i64: 128, 128>}, {pipeline_mode = #tpu.pipeline_mode<synchronous>, transform_indices = @transform_8, window_bounds = array<i64: 1, 128>}, {pipeline_mode = #tpu.pipeline_mode<synchronous>, transform_indices = @transform_9, window_bounds = array<i64: 1, 128>}, {pipeline_mode = #tpu.pipeline_mode<synchronous>, transform_indices = @transform_10, window_bounds = array<i64: 1, 128>}, {pipeline_mode = #tpu.pipeline_mode<synchronous>, transform_indices = @transform_11, window_bounds = array<i64: 128, 128>}, {pipeline_mode = #tpu.pipeline_mode<synchronous>, transform_indices = @transform_12, window_bounds = array<i64: 1, 128>}, {transform_indices = @transform_13, window_bounds = array<i64: 128, 128>}]} {
    %c0_i32 = arith.constant 0 : i32
    %0 = arith.cmpi eq, %arg1, %c0_i32 : i32
    %1 = arith.extui %0 : i1 to i32
    %c0_i32_0 = arith.constant 0 : i32
    %2 = arith.cmpi ne, %1, %c0_i32_0 : i32
    scf.if %2 {
      %cst_9 = arith.constant 0.000000e+00 : f32
      %24 = vector.broadcast %cst_9 : f32 to vector<128x128xf32>
      %c0_10 = arith.constant 0 : index
      %c0_11 = arith.constant 0 : index
      %25 = vector.load %arg16[%c0_10, %c0_11] : memref<128x128xf32, #tpu.memory_space<vmem>>, vector<128x128xf32>
      tpu.vector_store %arg16[%c0_10, %c0_11], %24 {strides = array<i32>} : memref<128x128xf32, #tpu.memory_space<vmem>>, vector<128x128xf32>,
    } else {
    }
    %c0 = arith.constant 0 : index
    %c0_1 = arith.constant 0 : index
    %3 = vector.load %arg2[%c0, %c0_1] : memref<1x128xi32, #tpu.memory_space<vmem>>, vector<1x128xi32>
    %c128_i32 = arith.constant 128 : i32
    %4 = arith.muli %arg0, %c128_i32 : i32
    %5 = vector.broadcast %4 : i32 to vector<1x128xi32>
    %6 = arith.subi %3, %5 : vector<1x128xi32>
    %7 = tpu.iota {dimensions = array<i32: 0>} : vector<128x128xi32>
    %8 = vector.broadcast %6 : vector<1x128xi32> to vector<128x128xi32>
    %9 = arith.cmpi eq, %7, %8 : vector<128x128xi32>
    %10 = arith.extui %9 : vector<128x128xi1> to vector<128x128xi32>
    %11 = arith.sitofp %10 : vector<128x128xi32> to vector<128x128xf32>
    %12 = arith.truncf %11 : vector<128x128xf32> to vector<128x128xbf16>
    %c128_i32_2 = arith.constant 128 : i32
    %13 = arith.muli %arg1, %c128_i32_2 : i32
    %14 = tpu.assume_multiple %13, 128 : i32
    %15 = arith.index_cast %14 : i32 to index
    %c0_3 = arith.constant 0 : index
    %16 = vector.load %arg3[%15, %c0_3] : memref<384x128xbf16, #tpu.memory_space<vmem>>, vector<128x128xbf16>
    %c0_4 = arith.constant 0 : index
    %c0_5 = arith.constant 0 : index
    %17 = vector.load %arg16[%c0_4, %c0_5] : memref<128x128xf32, #tpu.memory_space<vmem>>, vector<128x128xf32>
    %cst = arith.constant dense<0.000000e+00> : vector<128x128xf32>
    %18 = tpu.matmul %12, %16, %cst {dimension_numbers = #tpu.dot_dimension_numbers<[1], [0], [0], [1], [0, 0, 1, 1], [], []>} : vector<128x128xbf16>, vector<128x128xbf16>, vector<128x128xf32> -> vector<128x128xf32>
    %19 = arith.addf %17, %18 : vector<128x128xf32>
    %c0_6 = arith.constant 0 : index
    %c0_7 = arith.constant 0 : index
    %20 = vector.load %arg16[%c0_6, %c0_7] : memref<128x128xf32, #tpu.memory_space<vmem>>, vector<128x128xf32>
    tpu.vector_store %arg16[%c0_6, %c0_7], %19 {strides = array<i32>} : memref<128x128xf32, #tpu.memory_space<vmem>>, vector<128x128xf32>,
    %c2_i32 = arith.constant 2 : i32
    %21 = arith.cmpi eq, %arg1, %c2_i32 : i32
    %22 = arith.extui %21 : i1 to i32
    %c0_i32_8 = arith.constant 0 : i32
    %23 = arith.cmpi ne, %22, %c0_i32_8 : i32
    scf.if %23 {
      %c0_9 = arith.constant 0 : index
      %c0_10 = arith.constant 0 : index
      %24 = vector.load %arg16[%c0_9, %c0_10] : memref<128x128xf32, #tpu.memory_space<vmem>>, vector<128x128xf32>
      %c0_11 = arith.constant 0 : index
      %c0_12 = arith.constant 0 : index
      %25 = vector.load %arg4[%c0_11, %c0_12] : memref<1x128xf32, #tpu.memory_space<vmem>>, vector<1x128xf32>
      %26 = vector.broadcast %25 : vector<1x128xf32> to vector<128x128xf32>
      %27 = arith.addf %24, %26 : vector<128x128xf32>
      %28 = arith.truncf %27 : vector<128x128xf32> to vector<128x128xbf16>
      %c0_13 = arith.constant 0 : index
      %c0_14 = arith.constant 0 : index
      %29 = vector.load %arg5[%c0_13, %c0_14] : memref<128x128xbf16, #tpu.memory_space<vmem>>, vector<128x128xbf16>
      %cst_15 = arith.constant dense<0.000000e+00> : vector<128x128xf32>
      %30 = tpu.matmul %28, %29, %cst_15 {dimension_numbers = #tpu.dot_dimension_numbers<[1], [0], [0], [1], [0, 0, 1, 1], [], []>} : vector<128x128xbf16>, vector<128x128xbf16>, vector<128x128xf32> -> vector<128x128xf32>
      %c0_16 = arith.constant 0 : index
      %c0_17 = arith.constant 0 : index
      %31 = vector.load %arg6[%c0_16, %c0_17] : memref<1x128xf32, #tpu.memory_space<vmem>>, vector<1x128xf32>
      %32 = vector.broadcast %31 : vector<1x128xf32> to vector<128x128xf32>
      %33 = arith.addf %30, %32 : vector<128x128xf32>
      %c0_18 = arith.constant 0 : index
      %c0_19 = arith.constant 0 : index
      %34 = vector.load %arg7[%c0_18, %c0_19] : memref<1x128xf32, #tpu.memory_space<vmem>>, vector<1x128xf32>
      %c0_20 = arith.constant 0 : index
      %c0_21 = arith.constant 0 : index
      %35 = vector.load %arg8[%c0_20, %c0_21] : memref<1x128xf32, #tpu.memory_space<vmem>>, vector<1x128xf32>
      %cst_22 = arith.constant dense<0.000000e+00> : vector<128xf32>
      %36 = vector.multi_reduction <add>, %33, %cst_22 [1] : vector<128x128xf32> to vector<128xf32>
      %37 = vector.shape_cast %36 : vector<128xf32> to vector<128x1xf32>
      %cst_23 = arith.constant 1.280000e+02 : f32
      %38 = vector.broadcast %cst_23 : f32 to vector<128x1xf32>
      %39 = arith.divf %37, %38 : vector<128x1xf32>
      %40 = vector.broadcast %39 : vector<128x1xf32> to vector<128x128xf32>
      %41 = arith.subf %33, %40 : vector<128x128xf32>
      %42 = arith.mulf %41, %41 : vector<128x128xf32>
      %cst_24 = arith.constant dense<0.000000e+00> : vector<128xf32>
      %43 = vector.multi_reduction <add>, %42, %cst_24 [1] : vector<128x128xf32> to vector<128xf32>
      %44 = vector.shape_cast %43 : vector<128xf32> to vector<128x1xf32>
      %cst_25 = arith.constant 1.280000e+02 : f32
      %45 = vector.broadcast %cst_25 : f32 to vector<128x1xf32>
      %46 = arith.divf %44, %45 : vector<128x1xf32>
      %47 = vector.broadcast %39 : vector<128x1xf32> to vector<128x128xf32>
      %48 = arith.subf %33, %47 : vector<128x128xf32>
      %cst_26 = arith.constant 9.99999974E-6 : f32
      %49 = vector.broadcast %cst_26 : f32 to vector<128x1xf32>
      %50 = arith.addf %46, %49 : vector<128x1xf32>
      %51 = math.rsqrt %50 : vector<128x1xf32>
      %52 = vector.broadcast %51 : vector<128x1xf32> to vector<128x128xf32>
      %53 = arith.mulf %48, %52 : vector<128x128xf32>
      %54 = vector.broadcast %34 : vector<1x128xf32> to vector<128x128xf32>
      %55 = arith.mulf %53, %54 : vector<128x128xf32>
      %56 = vector.broadcast %35 : vector<1x128xf32> to vector<128x128xf32>
      %57 = arith.addf %55, %56 : vector<128x128xf32>
      %cst_27 = arith.constant 0.000000e+00 : f32
      %58 = vector.broadcast %cst_27 : f32 to vector<128x128xf32>
      %59 = arith.maximumf %57, %58 : vector<128x128xf32>
      %60 = arith.truncf %59 : vector<128x128xf32> to vector<128x128xbf16>
      %c0_28 = arith.constant 0 : index
      %c0_29 = arith.constant 0 : index
      %61 = vector.load %arg9[%c0_28, %c0_29] : memref<128x128xbf16, #tpu.memory_space<vmem>>, vector<128x128xbf16>
      %cst_30 = arith.constant dense<0.000000e+00> : vector<128x128xf32>
      %62 = tpu.matmul %60, %61, %cst_30 {dimension_numbers = #tpu.dot_dimension_numbers<[1], [0], [0], [1], [0, 0, 1, 1], [], []>} : vector<128x128xbf16>, vector<128x128xbf16>, vector<128x128xf32> -> vector<128x128xf32>
      %c0_31 = arith.constant 0 : index
      %c0_32 = arith.constant 0 : index
      %63 = vector.load %arg10[%c0_31, %c0_32] : memref<1x128xf32, #tpu.memory_space<vmem>>, vector<1x128xf32>
      %64 = vector.broadcast %63 : vector<1x128xf32> to vector<128x128xf32>
      %65 = arith.addf %62, %64 : vector<128x128xf32>
      %c0_33 = arith.constant 0 : index
      %c0_34 = arith.constant 0 : index
      %66 = vector.load %arg11[%c0_33, %c0_34] : memref<1x128xf32, #tpu.memory_space<vmem>>, vector<1x128xf32>
      %c0_35 = arith.constant 0 : index
      %c0_36 = arith.constant 0 : index
      %67 = vector.load %arg12[%c0_35, %c0_36] : memref<1x128xf32, #tpu.memory_space<vmem>>, vector<1x128xf32>
      %cst_37 = arith.constant dense<0.000000e+00> : vector<128xf32>
      %68 = vector.multi_reduction <add>, %65, %cst_37 [1] : vector<128x128xf32> to vector<128xf32>
      %69 = vector.shape_cast %68 : vector<128xf32> to vector<128x1xf32>
      %cst_38 = arith.constant 1.280000e+02 : f32
      %70 = vector.broadcast %cst_38 : f32 to vector<128x1xf32>
      %71 = arith.divf %69, %70 : vector<128x1xf32>
      %72 = vector.broadcast %71 : vector<128x1xf32> to vector<128x128xf32>
      %73 = arith.subf %65, %72 : vector<128x128xf32>
      %74 = arith.mulf %73, %73 : vector<128x128xf32>
      %cst_39 = arith.constant dense<0.000000e+00> : vector<128xf32>
      %75 = vector.multi_reduction <add>, %74, %cst_39 [1] : vector<128x128xf32> to vector<128xf32>
      %76 = vector.shape_cast %75 : vector<128xf32> to vector<128x1xf32>
      %cst_40 = arith.constant 1.280000e+02 : f32
      %77 = vector.broadcast %cst_40 : f32 to vector<128x1xf32>
      %78 = arith.divf %76, %77 : vector<128x1xf32>
      %79 = vector.broadcast %71 : vector<128x1xf32> to vector<128x128xf32>
      %80 = arith.subf %65, %79 : vector<128x128xf32>
      %cst_41 = arith.constant 9.99999974E-6 : f32
      %81 = vector.broadcast %cst_41 : f32 to vector<128x1xf32>
      %82 = arith.addf %78, %81 : vector<128x1xf32>
      %83 = math.rsqrt %82 : vector<128x1xf32>
      %84 = vector.broadcast %83 : vector<128x1xf32> to vector<128x128xf32>
      %85 = arith.mulf %80, %84 : vector<128x128xf32>
      %86 = vector.broadcast %66 : vector<1x128xf32> to vector<128x128xf32>
      %87 = arith.mulf %85, %86 : vector<128x128xf32>
      %88 = vector.broadcast %67 : vector<1x128xf32> to vector<128x128xf32>
      %89 = arith.addf %87, %88 : vector<128x128xf32>
      %cst_42 = arith.constant 0.000000e+00 : f32
      %90 = vector.broadcast %cst_42 : f32 to vector<128x128xf32>
      %91 = arith.maximumf %89, %90 : vector<128x128xf32>
      %92 = arith.truncf %91 : vector<128x128xf32> to vector<128x128xbf16>
      %c0_43 = arith.constant 0 : index
      %c0_44 = arith.constant 0 : index
      %93 = vector.load %arg13[%c0_43, %c0_44] : memref<128x128xbf16, #tpu.memory_space<vmem>>, vector<128x128xbf16>
      %cst_45 = arith.constant dense<0.000000e+00> : vector<128x128xf32>
      %94 = tpu.matmul %92, %93, %cst_45 {dimension_numbers = #tpu.dot_dimension_numbers<[1], [0], [0], [1], [0, 0, 1, 1], [], []>} : vector<128x128xbf16>, vector<128x128xbf16>, vector<128x128xf32> -> vector<128x128xf32>
      %c0_46 = arith.constant 0 : index
      %c0_47 = arith.constant 0 : index
      %95 = vector.load %arg14[%c0_46, %c0_47] : memref<1x128xf32, #tpu.memory_space<vmem>>, vector<1x128xf32>
      %96 = vector.broadcast %95 : vector<1x128xf32> to vector<128x128xf32>
      %97 = arith.addf %94, %96 : vector<128x128xf32>
      %c0_48 = arith.constant 0 : index
      %c0_49 = arith.constant 0 : index
      %98 = vector.load %arg15[%c0_48, %c0_49] : memref<128x128xf32, #tpu.memory_space<vmem>>, vector<128x128xf32>
      tpu.vector_store %arg15[%c0_48, %c0_49], %97 {strides = array<i32>} : memref<128x128xf32, #tpu.memory_space<vmem>>, vector<128x128xf32>,
    } else {
    }
    return
  }
  func.func @transform_0(%arg0: i32, %arg1: i32) -> (i32, i32) {
    %c0_i32 = arith.constant 0 : i32
    %c0_i32_0 = arith.constant 0 : i32
    return %c0_i32, %arg1 : i32, i32
  }
  func.func @transform_1(%arg0: i32, %arg1: i32) -> (i32, i32) {
    %c0_i32 = arith.constant 0 : i32
    %c0_i32_0 = arith.constant 0 : i32
    %c0_i32_1 = arith.constant 0 : i32
    return %c0_i32, %c0_i32_0 : i32, i32
  }
  func.func @transform_2(%arg0: i32, %arg1: i32) -> (i32, i32) {
    %c0_i32 = arith.constant 0 : i32
    %c0_i32_0 = arith.constant 0 : i32
    %c0_i32_1 = arith.constant 0 : i32
    return %c0_i32, %c0_i32_0 : i32, i32
  }
  func.func @transform_3(%arg0: i32, %arg1: i32) -> (i32, i32) {
    %c0_i32 = arith.constant 0 : i32
    %c0_i32_0 = arith.constant 0 : i32
    %c0_i32_1 = arith.constant 0 : i32
    return %c0_i32, %c0_i32_0 : i32, i32
  }
  func.func @transform_4(%arg0: i32, %arg1: i32) -> (i32, i32) {
    %c0_i32 = arith.constant 0 : i32
    %c0_i32_0 = arith.constant 0 : i32
    %c0_i32_1 = arith.constant 0 : i32
    return %c0_i32, %c0_i32_0 : i32, i32
  }
  func.func @transform_5(%arg0: i32, %arg1: i32) -> (i32, i32) {
    %c0_i32 = arith.constant 0 : i32
    %c0_i32_0 = arith.constant 0 : i32
    %c0_i32_1 = arith.constant 0 : i32
    return %c0_i32, %c0_i32_0 : i32, i32
  }
  func.func @transform_6(%arg0: i32, %arg1: i32) -> (i32, i32) {
    %c0_i32 = arith.constant 0 : i32
    %c0_i32_0 = arith.constant 0 : i32
    %c0_i32_1 = arith.constant 0 : i32
    return %c0_i32, %c0_i32_0 : i32, i32
  }
  func.func @transform_7(%arg0: i32, %arg1: i32) -> (i32, i32) {
    %c0_i32 = arith.constant 0 : i32
    %c0_i32_0 = arith.constant 0 : i32
    %c0_i32_1 = arith.constant 0 : i32
    return %c0_i32, %c0_i32_0 : i32, i32
  }
  func.func @transform_8(%arg0: i32, %arg1: i32) -> (i32, i32) {
    %c0_i32 = arith.constant 0 : i32
    %c0_i32_0 = arith.constant 0 : i32
    %c0_i32_1 = arith.constant 0 : i32
    return %c0_i32, %c0_i32_0 : i32, i32
  }
  func.func @transform_9(%arg0: i32, %arg1: i32) -> (i32, i32) {
    %c0_i32 = arith.constant 0 : i32
    %c0_i32_0 = arith.constant 0 : i32
    %c0_i32_1 = arith.constant 0 : i32
    return %c0_i32, %c0_i32_0 : i32, i32
  }
  func.func @transform_10(%arg0: i32, %arg1: i32) -> (i32, i32) {
    %c0_i32 = arith.constant 0 : i32
    %c0_i32_0 = arith.constant 0 : i32
    %c0_i32_1 = arith.constant 0 : i32
    return %c0_i32, %c0_i32_0 : i32, i32
  }
  func.func @transform_11(%arg0: i32, %arg1: i32) -> (i32, i32) {
    %c0_i32 = arith.constant 0 : i32
    %c0_i32_0 = arith.constant 0 : i32
    %c0_i32_1 = arith.constant 0 : i32
    return %c0_i32, %c0_i32_0 : i32, i32
  }
  func.func @transform_12(%arg0: i32, %arg1: i32) -> (i32, i32) {
    %c0_i32 = arith.constant 0 : i32
    %c0_i32_0 = arith.constant 0 : i32
    %c0_i32_1 = arith.constant 0 : i32
    return %c0_i32, %c0_i32_0 : i32, i32
  }
  func.func @transform_13(%arg0: i32, %arg1: i32) -> (i32, i32) {
    %c0_i32 = arith.constant 0 : i32
    %c0_i32_0 = arith.constant 0 : i32
    return %arg0, %c0_i32 : i32, i32
  }
}

</mosaic_0001>

<llo_original>
// kernel: _edge_aggr_padded.1
$region0: #{_edge_aggr_padded.1}
  #allocation0 [shape = 'u32[]', space=smem, size = 0x4, offset = 0x4, fixed_abs, tag = 'smem constant byte address 0x4 - core index']
  #allocation1 [shape = 'u32[144,128]{1,0:T(1,128)}', space=vmem, size = 0x12000, scoped, tag = 'internal scratch']
  #allocation2 [shape = 'f32[128,128]{1,0:T(8,128)}', space=vmem, size = 0x10000, scoped, tag = 'scratch operand']
  %s0 = inlined_call_operand.vmem [shape: s32[1,384], index: 0, kind: input, shape index: {}]
  %s1 = inlined_call_operand.vmem [shape: bf16[384,128], index: 1, kind: input, shape index: {}]
  %s2 = inlined_call_operand.vmem [shape: f32[1,128], index: 2, kind: input, shape index: {}]
  %s3 = inlined_call_operand.vmem [shape: bf16[128,128], index: 3, kind: input, shape index: {}]
  %s4 = inlined_call_operand.vmem [shape: f32[1,128], index: 4, kind: input, shape index: {}]
  %s5 = inlined_call_operand.vmem [shape: f32[1,128], index: 5, kind: input, shape index: {}]
  %s6 = inlined_call_operand.vmem [shape: f32[1,128], index: 6, kind: input, shape index: {}]
  %s7 = inlined_call_operand.vmem [shape: bf16[128,128], index: 7, kind: input, shape index: {}]
  %s8 = inlined_call_operand.vmem [shape: f32[1,128], index: 8, kind: input, shape index: {}]
  %s9 = inlined_call_operand.vmem [shape: f32[1,128], index: 9, kind: input, shape index: {}]
  %s10 = inlined_call_operand.vmem [shape: f32[1,128], index: 10, kind: input, shape index: {}]
  %s11 = inlined_call_operand.vmem [shape: bf16[128,128], index: 11, kind: input, shape index: {}]
  %s12 = inlined_call_operand.vmem [shape: f32[1,128], index: 12, kind: input, shape index: {}]
  %s13 = inlined_call_operand.vmem [shape: f32[384,128], index: 13, kind: output, shape index: {}]
  %s14 = sld [smem:[#allocation0]]
  $region93: #{_edge_aggr_padded.1} parent=0
    _
  %s16 = ssub.s32 1, %s14
  %s17 = scalar_select 0, %s16, %s14
  loop: start=0, step=1, limit=11
  $region2: #{_edge_aggr_padded.1} parent=0 // loop_pre_header
    _
  $region3: #{_edge_aggr_padded.1} parent=0 // loop_header
    %s19 = sphi 0, %s23
    %p20 = scmp.ge.s32.totalorder %s19, 11
    %s26 = sphi 0, %s38
    %s27 = sphi 0, %s34
    %s28 = sphi 0, %s26
    %s29 = sphi 0, %s27
    %s30 = sphi 0, %s28
    %s31 = sphi 0, %s29
    %s41 = sphi 0, %s43
    %s44 = sphi 0, %s41
    %s45 = sphi 0, %s44
    %s61 = sphi 0, %s45
    %s65 = sphi 0, %s65
    %s67 = sphi 0, %s65
    %s68 = sphi 0, %s67
    %s82 = sphi 0, %s68
    %s86 = sphi 0, %s86
    %s88 = sphi 0, %s86
    %s89 = sphi 0, %s88
    %s103 = sphi 0, %s89
    %s107 = sphi 0, %s107
    %s109 = sphi 0, %s107
    %s110 = sphi 0, %s109
    %s124 = sphi 0, %s110
    %s128 = sphi 0, %s128
    %s130 = sphi 0, %s128
    %s131 = sphi 0, %s130
    %s145 = sphi 0, %s131
    %s149 = sphi 0, %s149
    %s151 = sphi 0, %s149
    %s152 = sphi 0, %s151
    %s166 = sphi 0, %s152
    %s170 = sphi 0, %s170
    %s172 = sphi 0, %s170
    %s173 = sphi 0, %s172
    %s187 = sphi 0, %s173
    %s191 = sphi 0, %s191
    %s193 = sphi 0, %s191
    %s194 = sphi 0, %s193
    %s208 = sphi 0, %s194
    %s212 = sphi 0, %s212
    %s214 = sphi 0, %s212
    %s215 = sphi 0, %s214
    %s229 = sphi 0, %s215
    %s233 = sphi 0, %s233
    %s235 = sphi 0, %s233
    %s236 = sphi 0, %s235
    %s250 = sphi 0, %s236
    %s254 = sphi 0, %s254
    %s256 = sphi 0, %s254
    %s257 = sphi 0, %s256
    %s271 = sphi 0, %s257
    %s275 = sphi 0, %s275
    %s277 = sphi 0, %s275
    %s278 = sphi 0, %s277
    %s292 = sphi 0, %s278
    %s296 = sphi 0, %s296
    %s298 = sphi 0, %s296
    %s299 = sphi 0, %s298
    %s313 = sphi 0, %s299
    %s319 = sphi 0, %s321
    %s322 = sphi 0, %s319
    %s323 = sphi 0, %s322
    %s339 = sphi 0, %s323
  $region4: #{_edge_aggr_padded.1} parent=0 // loop_header_branch
    %22 = sbr.rel (%p20) target = $region8
  $region5: #{_edge_aggr_padded.1} parent=0 // loop_body
    %s24 = ssub.s32 %s19, 1
    %s25 = ssub.s32 %s19, 2
    %s32 = sadd.s32 1, %s27
    %p33 = scmp.ge.s32.totalorder %s32, 3
    %s34 = scalar_select %p33, 0, %s32
    %s35 = sadd.s32 1, %s26
    %s36 = scalar_select %p33, %s35, %s26
    %p37 = scmp.ge.s32.totalorder %s36, 3
    %s38 = scalar_select %p37, 0, %s36
    %s39 = ssub.s32 %s27, %s34
    %p40 = scmp.eq.s32.totalorder %s39, 0
    %s42 = sadd.s32 %s41, 1
    %s43 = scalar_select %p40, %s41, %s42
    %p46 = pneg %p40
    %p47 = scmp.eq.s32.totalorder %s19, 8
    %p48 = por %p46, %p47
    %p49 = scmp.ne.s32.totalorder %s41, %s44
    %p50 = scmp.eq.s32.totalorder %s19, 0
    %p51 = por %p49, %p50
    %p52 = scmp.ne.s32.totalorder %s41, %s44
    %p53 = scmp.eq.s32.totalorder %s24, 8
    %p54 = por %p52, %p53
    %p55 = scmp.ne.s32.totalorder %s44, %s45
    %p56 = scmp.eq.s32.totalorder %s24, 0
    %p57 = por %p55, %p56
    %p58 = scmp.ne.s32.totalorder %s44, %s45
    %p59 = scmp.eq.s32.totalorder %s25, 8
    %p60 = por %p58, %p59
    %p62 = scmp.ne.s32.totalorder %s45, %s61
    %p63 = scmp.eq.s32.totalorder %s25, 0
    %p64 = por %p62, %p63
    %s66 = sadd.s32 %s65, 1
    %p69 = scmp.eq.s32.totalorder %s19, 8
    %p70 = scmp.ne.s32.totalorder %s65, %s67
    %p71 = scmp.eq.s32.totalorder %s19, 0
    %p72 = por %p70, %p71
    %p73 = scmp.ne.s32.totalorder %s65, %s67
    %p74 = scmp.eq.s32.totalorder %s24, 8
    %p75 = por %p73, %p74
    %p76 = scmp.ne.s32.totalorder %s67, %s68
    %p77 = scmp.eq.s32.totalorder %s24, 0
    %p78 = por %p76, %p77
    %p79 = scmp.ne.s32.totalorder %s67, %s68
    %p80 = scmp.eq.s32.totalorder %s25, 8
    %p81 = por %p79, %p80
    %p83 = scmp.ne.s32.totalorder %s68, %s82
    %p84 = scmp.eq.s32.totalorder %s25, 0
    %p85 = por %p83, %p84
    %s87 = sadd.s32 %s86, 1
    %p90 = scmp.eq.s32.totalorder %s19, 8
    %p91 = scmp.ne.s32.totalorder %s86, %s88
    %p92 = scmp.eq.s32.totalorder %s19, 0
    %p93 = por %p91, %p92
    %p94 = scmp.ne.s32.totalorder %s86, %s88
    %p95 = scmp.eq.s32.totalorder %s24, 8
    %p96 = por %p94, %p95
    %p97 = scmp.ne.s32.totalorder %s88, %s89
    %p98 = scmp.eq.s32.totalorder %s24, 0
    %p99 = por %p97, %p98
    %p100 = scmp.ne.s32.totalorder %s88, %s89
    %p101 = scmp.eq.s32.totalorder %s25, 8
    %p102 = por %p100, %p101
    %p104 = scmp.ne.s32.totalorder %s89, %s103
    %p105 = scmp.eq.s32.totalorder %s25, 0
    %p106 = por %p104, %p105
    %s108 = sadd.s32 %s107, 1
    %p111 = scmp.eq.s32.totalorder %s19, 8
    %p112 = scmp.ne.s32.totalorder %s107, %s109
    %p113 = scmp.eq.s32.totalorder %s19, 0
    %p114 = por %p112, %p113
    %p115 = scmp.ne.s32.totalorder %s107, %s109
    %p116 = scmp.eq.s32.totalorder %s24, 8
    %p117 = por %p115, %p116
    %p118 = scmp.ne.s32.totalorder %s109, %s110
    %p119 = scmp.eq.s32.totalorder %s24, 0
    %p120 = por %p118, %p119
    %p121 = scmp.ne.s32.totalorder %s109, %s110
    %p122 = scmp.eq.s32.totalorder %s25, 8
    %p123 = por %p121, %p122
    %p125 = scmp.ne.s32.totalorder %s110, %s124
    %p126 = scmp.eq.s32.totalorder %s25, 0
    %p127 = por %p125, %p126
    %s129 = sadd.s32 %s128, 1
    %p132 = scmp.eq.s32.totalorder %s19, 8
    %p133 = scmp.ne.s32.totalorder %s128, %s130
    %p134 = scmp.eq.s32.totalorder %s19, 0
    %p135 = por %p133, %p134
    %p136 = scmp.ne.s32.totalorder %s128, %s130
    %p137 = scmp.eq.s32.totalorder %s24, 8
    %p138 = por %p136, %p137
    %p139 = scmp.ne.s32.totalorder %s130, %s131
    %p140 = scmp.eq.s32.totalorder %s24, 0
    %p141 = por %p139, %p140
    %p142 = scmp.ne.s32.totalorder %s130, %s131
    %p143 = scmp.eq.s32.totalorder %s25, 8
    %p144 = por %p142, %p143
    %p146 = scmp.ne.s32.totalorder %s131, %s145
    %p147 = scmp.eq.s32.totalorder %s25, 0
    %p148 = por %p146, %p147
    %s150 = sadd.s32 %s149, 1
    %p153 = scmp.eq.s32.totalorder %s19, 8
    %p154 = scmp.ne.s32.totalorder %s149, %s151
    %p155 = scmp.eq.s32.totalorder %s19, 0
    %p156 = por %p154, %p155
    %p157 = scmp.ne.s32.totalorder %s149, %s151
    %p158 = scmp.eq.s32.totalorder %s24, 8
    %p159 = por %p157, %p158
    %p160 = scmp.ne.s32.totalorder %s151, %s152
    %p161 = scmp.eq.s32.totalorder %s24, 0
    %p162 = por %p160, %p161
    %p163 = scmp.ne.s32.totalorder %s151, %s152
    %p164 = scmp.eq.s32.totalorder %s25, 8
    %p165 = por %p163, %p164
    %p167 = scmp.ne.s32.totalorder %s152, %s166
    %p168 = scmp.eq.s32.totalorder %s25, 0
    %p169 = por %p167, %p168
    %s171 = sadd.s32 %s170, 1
    %p174 = scmp.eq.s32.totalorder %s19, 8
    %p175 = scmp.ne.s32.totalorder %s170, %s172
    %p176 = scmp.eq.s32.totalorder %s19, 0
    %p177 = por %p175, %p176
    %p178 = scmp.ne.s32.totalorder %s170, %s172
    %p179 = scmp.eq.s32.totalorder %s24, 8
    %p180 = por %p178, %p179
    %p181 = scmp.ne.s32.totalorder %s172, %s173
    %p182 = scmp.eq.s32.totalorder %s24, 0
    %p183 = por %p181, %p182
    %p184 = scmp.ne.s32.totalorder %s172, %s173
    %p185 = scmp.eq.s32.totalorder %s25, 8
    %p186 = por %p184, %p185
    %p188 = scmp.ne.s32.totalorder %s173, %s187
    %p189 = scmp.eq.s32.totalorder %s25, 0
    %p190 = por %p188, %p189
    %s192 = sadd.s32 %s191, 1
    %p195 = scmp.eq.s32.totalorder %s19, 8
    %p196 = scmp.ne.s32.totalorder %s191, %s193
    %p197 = scmp.eq.s32.totalorder %s19, 0
    %p198 = por %p196, %p197
    %p199 = scmp.ne.s32.totalorder %s191, %s193
    %p200 = scmp.eq.s32.totalorder %s24, 8
    %p201 = por %p199, %p200
    %p202 = scmp.ne.s32.totalorder %s193, %s194
    %p203 = scmp.eq.s32.totalorder %s24, 0
    %p204 = por %p202, %p203
    %p205 = scmp.ne.s32.totalorder %s193, %s194
    %p206 = scmp.eq.s32.totalorder %s25, 8
    %p207 = por %p205, %p206
    %p209 = scmp.ne.s32.totalorder %s194, %s208
    %p210 = scmp.eq.s32.totalorder %s25, 0
    %p211 = por %p209, %p210
    %s213 = sadd.s32 %s212, 1
    %p216 = scmp.eq.s32.totalorder %s19, 8
    %p217 = scmp.ne.s32.totalorder %s212, %s214
    %p218 = scmp.eq.s32.totalorder %s19, 0
    %p219 = por %p217, %p218
    %p220 = scmp.ne.s32.totalorder %s212, %s214
    %p221 = scmp.eq.s32.totalorder %s24, 8
    %p222 = por %p220, %p221
    %p223 = scmp.ne.s32.totalorder %s214, %s215
    %p224 = scmp.eq.s32.totalorder %s24, 0
    %p225 = por %p223, %p224
    %p226 = scmp.ne.s32.totalorder %s214, %s215
    %p227 = scmp.eq.s32.totalorder %s25, 8
    %p228 = por %p226, %p227
    %p230 = scmp.ne.s32.totalorder %s215, %s229
    %p231 = scmp.eq.s32.totalorder %s25, 0
    %p232 = por %p230, %p231
    %s234 = sadd.s32 %s233, 1
    %p237 = scmp.eq.s32.totalorder %s19, 8
    %p238 = scmp.ne.s32.totalorder %s233, %s235
    %p239 = scmp.eq.s32.totalorder %s19, 0
    %p240 = por %p238, %p239
    %p241 = scmp.ne.s32.totalorder %s233, %s235
    %p242 = scmp.eq.s32.totalorder %s24, 8
    %p243 = por %p241, %p242
    %p244 = scmp.ne.s32.totalorder %s235, %s236
    %p245 = scmp.eq.s32.totalorder %s24, 0
    %p246 = por %p244, %p245
    %p247 = scmp.ne.s32.totalorder %s235, %s236
    %p248 = scmp.eq.s32.totalorder %s25, 8
    %p249 = por %p247, %p248
    %p251 = scmp.ne.s32.totalorder %s236, %s250
    %p252 = scmp.eq.s32.totalorder %s25, 0
    %p253 = por %p251, %p252
    %s255 = sadd.s32 %s254, 1
    %p258 = scmp.eq.s32.totalorder %s19, 8
    %p259 = scmp.ne.s32.totalorder %s254, %s256
    %p260 = scmp.eq.s32.totalorder %s19, 0
    %p261 = por %p259, %p260
    %p262 = scmp.ne.s32.totalorder %s254, %s256
    %p263 = scmp.eq.s32.totalorder %s24, 8
    %p264 = por %p262, %p263
    %p265 = scmp.ne.s32.totalorder %s256, %s257
    %p266 = scmp.eq.s32.totalorder %s24, 0
    %p267 = por %p265, %p266
    %p268 = scmp.ne.s32.totalorder %s256, %s257
    %p269 = scmp.eq.s32.totalorder %s25, 8
    %p270 = por %p268, %p269
    %p272 = scmp.ne.s32.totalorder %s257, %s271
    %p273 = scmp.eq.s32.totalorder %s25, 0
    %p274 = por %p272, %p273
    %s276 = sadd.s32 %s275, 1
    %p279 = scmp.eq.s32.totalorder %s19, 8
    %p280 = scmp.ne.s32.totalorder %s275, %s277
    %p281 = scmp.eq.s32.totalorder %s19, 0
    %p282 = por %p280, %p281
    %p283 = scmp.ne.s32.totalorder %s275, %s277
    %p284 = scmp.eq.s32.totalorder %s24, 8
    %p285 = por %p283, %p284
    %p286 = scmp.ne.s32.totalorder %s277, %s278
    %p287 = scmp.eq.s32.totalorder %s24, 0
    %p288 = por %p286, %p287
    %p289 = scmp.ne.s32.totalorder %s277, %s278
    %p290 = scmp.eq.s32.totalorder %s25, 8
    %p291 = por %p289, %p290
    %p293 = scmp.ne.s32.totalorder %s278, %s292
    %p294 = scmp.eq.s32.totalorder %s25, 0
    %p295 = por %p293, %p294
    %s297 = sadd.s32 %s296, 1
    %p300 = scmp.eq.s32.totalorder %s19, 8
    %p301 = scmp.ne.s32.totalorder %s296, %s298
    %p302 = scmp.eq.s32.totalorder %s19, 0
    %p303 = por %p301, %p302
    %p304 = scmp.ne.s32.totalorder %s296, %s298
    %p305 = scmp.eq.s32.totalorder %s24, 8
    %p306 = por %p304, %p305
    %p307 = scmp.ne.s32.totalorder %s298, %s299
    %p308 = scmp.eq.s32.totalorder %s24, 0
    %p309 = por %p307, %p308
    %p310 = scmp.ne.s32.totalorder %s298, %s299
    %p311 = scmp.eq.s32.totalorder %s25, 8
    %p312 = por %p310, %p311
    %p314 = scmp.ne.s32.totalorder %s299, %s313
    %p315 = scmp.eq.s32.totalorder %s25, 0
    %p316 = por %p314, %p315
    %s317 = ssub.s32 %s26, %s38
    %p318 = scmp.eq.s32.totalorder %s317, 0
    %s320 = sadd.s32 %s319, 1
    %s321 = scalar_select %p318, %s319, %s320
    %p324 = pneg %p318
    %p325 = scmp.eq.s32.totalorder %s19, 8
    %p326 = por %p324, %p325
    %p327 = scmp.ne.s32.totalorder %s319, %s322
    %p328 = scmp.eq.s32.totalorder %s19, 0
    %p329 = por %p327, %p328
    %p330 = scmp.ne.s32.totalorder %s319, %s322
    %p331 = scmp.eq.s32.totalorder %s24, 8
    %p332 = por %p330, %p331
    %p333 = scmp.ne.s32.totalorder %s322, %s323
    %p334 = scmp.eq.s32.totalorder %s24, 0
    %p335 = por %p333, %p334
    %p336 = scmp.ne.s32.totalorder %s322, %s323
    %p337 = scmp.eq.s32.totalorder %s25, 8
    %p338 = por %p336, %p337
    %p340 = scmp.ne.s32.totalorder %s323, %s339
    %p341 = scmp.eq.s32.totalorder %s25, 0
    %p342 = por %p340, %p341
    %p343 = scmp.le.s32.totalorder 1, %s19
    %p344 = scmp.lt.s32.totalorder %s19, 10
    %p345 = pnand %p343, %p344
    %p346 = pneg %p345
    // Predicated region
    $region9: #{_edge_aggr_padded.1} parent=5 // pred_check
      _
    $region10: #{_edge_aggr_padded.1} parent=5 // pred_check_branch
      %348 = sbr.rel (%p345) target = $region12
    $region11: #{_edge_aggr_padded.1} parent=5 // pred_region
      %s349 = ssub.s32 %s19, 1
      // Predicated region
      $region13: #{_edge_aggr_padded.1} parent=11 // pred_check
        %p350 = pneg %p78
      $region14: #{_edge_aggr_padded.1} parent=11 // pred_check_branch
        %352 = sbr.rel (%p350) target = $region16
      $region15: #{_edge_aggr_padded.1} parent=11 // pred_region
        _
      $region16: #{_edge_aggr_padded.1} parent=11 // pred_fallthru
        _
      // Predicated region
      $region17: #{_edge_aggr_padded.1} parent=11 // pred_check
        %p353 = pneg %p99
      $region18: #{_edge_aggr_padded.1} parent=11 // pred_check_branch
        %355 = sbr.rel (%p353) target = $region20
      $region19: #{_edge_aggr_padded.1} parent=11 // pred_region
        _
      $region20: #{_edge_aggr_padded.1} parent=11 // pred_fallthru
        _
      // Predicated region
      $region21: #{_edge_aggr_padded.1} parent=11 // pred_check
        %p356 = pneg %p120
      $region22: #{_edge_aggr_padded.1} parent=11 // pred_check_branch
        %358 = sbr.rel (%p356) target = $region24
      $region23: #{_edge_aggr_padded.1} parent=11 // pred_region
        _
      $region24: #{_edge_aggr_padded.1} parent=11 // pred_fallthru
        _
      // Predicated region
      $region25: #{_edge_aggr_padded.1} parent=11 // pred_check
        %p359 = pneg %p141
      $region26: #{_edge_aggr_padded.1} parent=11 // pred_check_branch
        %361 = sbr.rel (%p359) target = $region28
      $region27: #{_edge_aggr_padded.1} parent=11 // pred_region
        _
      $region28: #{_edge_aggr_padded.1} parent=11 // pred_fallthru
        _
      // Predicated region
      $region29: #{_edge_aggr_padded.1} parent=11 // pred_check
        %p362 = pneg %p162
      $region30: #{_edge_aggr_padded.1} parent=11 // pred_check_branch
        %364 = sbr.rel (%p362) target = $region32
      $region31: #{_edge_aggr_padded.1} parent=11 // pred_region
        _
      $region32: #{_edge_aggr_padded.1} parent=11 // pred_fallthru
        _
      // Predicated region
      $region33: #{_edge_aggr_padded.1} parent=11 // pred_check
        %p365 = pneg %p183
      $region34: #{_edge_aggr_padded.1} parent=11 // pred_check_branch
        %367 = sbr.rel (%p365) target = $region36
      $region35: #{_edge_aggr_padded.1} parent=11 // pred_region
        _
      $region36: #{_edge_aggr_padded.1} parent=11 // pred_fallthru
        _
      // Predicated region
      $region37: #{_edge_aggr_padded.1} parent=11 // pred_check
        %p368 = pneg %p204
      $region38: #{_edge_aggr_padded.1} parent=11 // pred_check_branch
        %370 = sbr.rel (%p368) target = $region40
      $region39: #{_edge_aggr_padded.1} parent=11 // pred_region
        _
      $region40: #{_edge_aggr_padded.1} parent=11 // pred_fallthru
        _
      // Predicated region
      $region41: #{_edge_aggr_padded.1} parent=11 // pred_check
        %p371 = pneg %p225
      $region42: #{_edge_aggr_padded.1} parent=11 // pred_check_branch
        %373 = sbr.rel (%p371) target = $region44
      $region43: #{_edge_aggr_padded.1} parent=11 // pred_region
        _
      $region44: #{_edge_aggr_padded.1} parent=11 // pred_fallthru
        _
      // Predicated region
      $region45: #{_edge_aggr_padded.1} parent=11 // pred_check
        %p374 = pneg %p246
      $region46: #{_edge_aggr_padded.1} parent=11 // pred_check_branch
        %376 = sbr.rel (%p374) target = $region48
      $region47: #{_edge_aggr_padded.1} parent=11 // pred_region
        _
      $region48: #{_edge_aggr_padded.1} parent=11 // pred_fallthru
        _
      // Predicated region
      $region49: #{_edge_aggr_padded.1} parent=11 // pred_check
        %p377 = pneg %p267
      $region50: #{_edge_aggr_padded.1} parent=11 // pred_check_branch
        %379 = sbr.rel (%p377) target = $region52
      $region51: #{_edge_aggr_padded.1} parent=11 // pred_region
        _
      $region52: #{_edge_aggr_padded.1} parent=11 // pred_fallthru
        _
      // Predicated region
      $region53: #{_edge_aggr_padded.1} parent=11 // pred_check
        %p380 = pneg %p288
      $region54: #{_edge_aggr_padded.1} parent=11 // pred_check_branch
        %382 = sbr.rel (%p380) target = $region56
      $region55: #{_edge_aggr_padded.1} parent=11 // pred_region
        _
      $region56: #{_edge_aggr_padded.1} parent=11 // pred_fallthru
        _
      // Predicated region
      $region57: #{_edge_aggr_padded.1} parent=11 // pred_check
        %p383 = pneg %p309
      $region58: #{_edge_aggr_padded.1} parent=11 // pred_check_branch
        %385 = sbr.rel (%p383) target = $region60
      $region59: #{_edge_aggr_padded.1} parent=11 // pred_region
        _
      $region60: #{_edge_aggr_padded.1} parent=11 // pred_fallthru
        _
    $region12: #{_edge_aggr_padded.1} parent=5 // pred_fallthru
      _
    %p386 = scmp.lt.s32.totalorder %s19, 9
    // Predicated region
    $region61: #{_edge_aggr_padded.1} parent=5 // pred_check
      %p387 = pneg %p386
    $region62: #{_edge_aggr_padded.1} parent=5 // pred_check_branch
      %389 = sbr.rel (%p387) target = $region64
    $region63: #{_edge_aggr_padded.1} parent=5 // pred_region
      // Predicated region
      $region65: #{_edge_aggr_padded.1} parent=63 // pred_check
        %p390 = pneg %p51
      $region66: #{_edge_aggr_padded.1} parent=63 // pred_check_branch
        %392 = sbr.rel (%p390) target = $region68
      $region67: #{_edge_aggr_padded.1} parent=63 // pred_region
        %p393 = scmp.lt.s32.totalorder %s27, 2
        %s394 = scalar_select %p393, %s27, 2
        %s395 = scalar_lea.vmem %s0, %s394
      $region68: #{_edge_aggr_padded.1} parent=63 // pred_fallthru
        _
    $region64: #{_edge_aggr_padded.1} parent=5 // pred_fallthru
      _
    %p396 = scmp.le.s32.totalorder 1, %s19
    %p397 = scmp.lt.s32.totalorder %s19, 10
    %p398 = pnand %p396, %p397
    %p399 = pneg %p398
    // Predicated region
    $region69: #{_edge_aggr_padded.1} parent=5 // pred_check
      _
    $region70: #{_edge_aggr_padded.1} parent=5 // pred_check_branch
      %401 = sbr.rel (%p398) target = $region72
    $region71: #{_edge_aggr_padded.1} parent=5 // pred_region
      %s402 = ssub.s32 %s19, 1
      %p403 = scmp.lt.s32.totalorder %s29, 2
      %s404 = scalar_select %p403, %s29, 2
      %s405 = scalar_lea.vmem %s0, %s404
      %p406 = pneg %p57
      %p407 = pneg %p54
      %p408 = pneg %p78
      %p409 = pneg %p75
      %p410 = pneg %p99
      %p411 = pneg %p96
      %p412 = pneg %p120
      %p413 = pneg %p117
      %p414 = pneg %p141
      %p415 = pneg %p138
      %p416 = pneg %p162
      %p417 = pneg %p159
      %p418 = pneg %p183
      %p419 = pneg %p180
      %p420 = pneg %p204
      %p421 = pneg %p201
      %p422 = pneg %p225
      %p423 = pneg %p222
      %p424 = pneg %p246
      %p425 = pneg %p243
      %p426 = pneg %p267
      %p427 = pneg %p264
      %p428 = pneg %p288
      %p429 = pneg %p285
      %p430 = pneg %p309
      %p431 = pneg %p306
      %p432 = pneg %p335
      %p433 = pneg %p332
      %s434 = smul.u32 16, %s28
      %p435 = scmp.lt.s32.totalorder %s434, 47
      %s436 = scalar_select %p435, %s434, 47
      %s437 = smul.addr %s436, 8
      %s438 = scalar_lea.vmem %s13, %s437
      %p439 = scmp.lt.s32.totalorder %s29, 2
      %s440 = scalar_select %p439, %s29, 2
      %s441 = scalar_lea.vmem %s0, %s440
      %s442 = smul.u32 16, %s28
      %p443 = scmp.lt.s32.totalorder %s442, 47
      %s444 = scalar_select %p443, %s442, 47
      %s445 = smul.addr %s444, 8
      %s446 = scalar_lea.vmem %s13, %s445
      %s447 = smul.u32 16, %s28
      %p449 = scmp.eq.s32.totalorder %s29, 0
      // Predicated region
      $region73: #{_edge_aggr_padded.1} parent=71 // pred_check
        %p450 = pneg %p449
      $region74: #{_edge_aggr_padded.1} parent=71 // pred_check_branch
        %452 = sbr.rel (%p450) target = $region76
      $region75: #{_edge_aggr_padded.1} parent=71 // pred_region
        %453 = vst [vmem:[#allocation2] sm:$0xff] 0.0
        %454 = vst [vmem:[#allocation2 + $0x8] sm:$0xff] 0.0
        %455 = vst [vmem:[#allocation2 + $0x10] sm:$0xff] 0.0
        %456 = vst [vmem:[#allocation2 + $0x18] sm:$0xff] 0.0
        %457 = vst [vmem:[#allocation2 + $0x20] sm:$0xff] 0.0
        %458 = vst [vmem:[#allocation2 + $0x28] sm:$0xff] 0.0
        %459 = vst [vmem:[#allocation2 + $0x30] sm:$0xff] 0.0
        %460 = vst [vmem:[#allocation2 + $0x38] sm:$0xff] 0.0
        %461 = vst [vmem:[#allocation2 + $0x40] sm:$0xff] 0.0
        %462 = vst [vmem:[#allocation2 + $0x48] sm:$0xff] 0.0
        %463 = vst [vmem:[#allocation2 + $0x50] sm:$0xff] 0.0
        %464 = vst [vmem:[#allocation2 + $0x58] sm:$0xff] 0.0
        %465 = vst [vmem:[#allocation2 + $0x60] sm:$0xff] 0.0
        %466 = vst [vmem:[#allocation2 + $0x68] sm:$0xff] 0.0
        %467 = vst [vmem:[#allocation2 + $0x70] sm:$0xff] 0.0
        %468 = vst [vmem:[#allocation2 + $0x78] sm:$0xff] 0.0
      $region76: #{_edge_aggr_padded.1} parent=71 // pred_fallthru
        _
      %v469 = vld [vmem:[%s441] sm:$0x1]
      %s470 = smul.u32 %s28, 128
      %v471 = vstv %s470
      %v472 = vsub.s32 %v469, %v471
      %v473 = vlaneseq
      %v474 = vshrl.u32 %v473, 7
      %v475 = vadd.s32 %v474, 8
      %v476 = vadd.s32 %v474, 16
      %v477 = vadd.s32 %v474, 24
      %v478 = vadd.s32 %v474, 32
      %v479 = vadd.s32 %v474, 40
      %v480 = vadd.s32 %v474, 48
      %v481 = vadd.s32 %v474, 56
      %v482 = vadd.s32 %v474, 64
      %v483 = vadd.s32 %v474, 72
      %v484 = vadd.s32 %v474, 80
      %v485 = vadd.s32 %v474, 88
      %v486 = vadd.s32 %v474, 96
      %v487 = vadd.s32 %v474, 104
      %v488 = vadd.s32 %v474, 112
      %v489 = vadd.s32 %v474, 120
      %v490 = vlaneseq
      %v491 = vshrl.u32 %v490, 7
      %v492 = vsub.s32 0, %v491
      %v493 = vrot.slane %v472, %v492
      %vm494 = vcmp.eq.s32.totalorder %v474, %v493
      %vm495 = vcmp.eq.s32.totalorder %v475, %v493
      %vm496 = vcmp.eq.s32.totalorder %v476, %v493
      %vm497 = vcmp.eq.s32.totalorder %v477, %v493
      %vm498 = vcmp.eq.s32.totalorder %v478, %v493
      %vm499 = vcmp.eq.s32.totalorder %v479, %v493
      %vm500 = vcmp.eq.s32.totalorder %v480, %v493
      %vm501 = vcmp.eq.s32.totalorder %v481, %v493
      %vm502 = vcmp.eq.s32.totalorder %v482, %v493
      %vm503 = vcmp.eq.s32.totalorder %v483, %v493
      %vm504 = vcmp.eq.s32.totalorder %v484, %v493
      %vm505 = vcmp.eq.s32.totalorder %v485, %v493
      %vm506 = vcmp.eq.s32.totalorder %v486, %v493
      %vm507 = vcmp.eq.s32.totalorder %v487, %v493
      %vm508 = vcmp.eq.s32.totalorder %v488, %v493
      %vm509 = vcmp.eq.s32.totalorder %v489, %v493
      %v510 = vsel %vm494, 1, 0
      %v511 = vsel %vm495, 1, 0
      %v512 = vsel %vm496, 1, 0
      %v513 = vsel %vm497, 1, 0
      %v514 = vsel %vm498, 1, 0
      %v515 = vsel %vm499, 1, 0
      %v516 = vsel %vm500, 1, 0
      %v517 = vsel %vm501, 1, 0
      %v518 = vsel %vm502, 1, 0
      %v519 = vsel %vm503, 1, 0
      %v520 = vsel %vm504, 1, 0
      %v521 = vsel %vm505, 1, 0
      %v522 = vsel %vm506, 1, 0
      %v523 = vsel %vm507, 1, 0
      %v524 = vsel %vm508, 1, 0
      %v525 = vsel %vm509, 1, 0
      %v526 = vcvt.s32.f32 %v510
      %v527 = vcvt.s32.f32 %v511
      %v528 = vcvt.s32.f32 %v512
      %v529 = vcvt.s32.f32 %v513
      %v530 = vcvt.s32.f32 %v514
      %v531 = vcvt.s32.f32 %v515
      %v532 = vcvt.s32.f32 %v516
      %v533 = vcvt.s32.f32 %v517
      %v534 = vcvt.s32.f32 %v518
      %v535 = vcvt.s32.f32 %v519
      %v536 = vcvt.s32.f32 %v520
      %v537 = vcvt.s32.f32 %v521
      %v538 = vcvt.s32.f32 %v522
      %v539 = vcvt.s32.f32 %v523
      %v540 = vcvt.s32.f32 %v524
      %v541 = vcvt.s32.f32 %v525
      %v542 = vpack.c.bf16 %v527, %v526
      %v543 = vpack.c.bf16 %v529, %v528
      %v544 = vpack.c.bf16 %v531, %v530
      %v545 = vpack.c.bf16 %v533, %v532
      %v546 = vpack.c.bf16 %v535, %v534
      %v547 = vpack.c.bf16 %v537, %v536
      %v548 = vpack.c.bf16 %v539, %v538
      %v549 = vpack.c.bf16 %v541, %v540
      %s550 = smul.u32 %s29, 128
      %s551 = sshra.s32 %s550, 3
      %s552 = sand.u32 %s550, 7
      %s553 = smul.addr %s551, 4
      %s554 = scalar_lea.vmem %s1, %s553
      %v555 = vld [vmem:[%s554] sm:$0xf]
      %v556 = vld [vmem:[%s554 + $0x4] sm:$0xf]
      %v557 = vld [vmem:[%s554 + $0x8] sm:$0xf]
      %v558 = vld [vmem:[%s554 + $0xc] sm:$0xf]
      %v559 = vld [vmem:[%s554 + $0x10] sm:$0xf]
      %v560 = vld [vmem:[%s554 + $0x14] sm:$0xf]
      %v561 = vld [vmem:[%s554 + $0x18] sm:$0xf]
      %v562 = vld [vmem:[%s554 + $0x1c] sm:$0xf]
      %v563 = vld [vmem:[%s554 + $0x20] sm:$0xf]
      %v564 = vld [vmem:[%s554 + $0x24] sm:$0xf]
      %v565 = vld [vmem:[%s554 + $0x28] sm:$0xf]
      %v566 = vld [vmem:[%s554 + $0x2c] sm:$0xf]
      %v567 = vld [vmem:[%s554 + $0x30] sm:$0xf]
      %v568 = vld [vmem:[%s554 + $0x34] sm:$0xf]
      %v569 = vld [vmem:[%s554 + $0x38] sm:$0xf]
      %v570 = vld [vmem:[%s554 + $0x3c] sm:$0xf]
      %v571 = vld [vmem:[#allocation2] sm:$0xff]
      %v572 = vld [vmem:[#allocation2 + $0x8] sm:$0xff]
      %v573 = vld [vmem:[#allocation2 + $0x10] sm:$0xff]
      %v574 = vld [vmem:[#allocation2 + $0x18] sm:$0xff]
      %v575 = vld [vmem:[#allocation2 + $0x20] sm:$0xff]
      %v576 = vld [vmem:[#allocation2 + $0x28] sm:$0xff]
      %v577 = vld [vmem:[#allocation2 + $0x30] sm:$0xff]
      %v578 = vld [vmem:[#allocation2 + $0x38] sm:$0xff]
      %v579 = vld [vmem:[#allocation2 + $0x40] sm:$0xff]
      %v580 = vld [vmem:[#allocation2 + $0x48] sm:$0xff]
      %v581 = vld [vmem:[#allocation2 + $0x50] sm:$0xff]
      %v582 = vld [vmem:[#allocation2 + $0x58] sm:$0xff]
      %v583 = vld [vmem:[#allocation2 + $0x60] sm:$0xff]
      %v584 = vld [vmem:[#allocation2 + $0x68] sm:$0xff]
      %v585 = vld [vmem:[#allocation2 + $0x70] sm:$0xff]
      %v586 = vld [vmem:[#allocation2 + $0x78] sm:$0xff]
      %v603 = vunpack.c.l.b16 %v555
      %v604 = vunpack.c.l.b16 %v556
      %v605 = vunpack.c.l.b16 %v557
      %v606 = vunpack.c.l.b16 %v558
      %v607 = vunpack.c.l.b16 %v559
      %v608 = vunpack.c.l.b16 %v560
      %v609 = vunpack.c.l.b16 %v561
      %v610 = vunpack.c.l.b16 %v562
      %v611 = vunpack.c.l.b16 %v563
      %v612 = vunpack.c.l.b16 %v564
      %v613 = vunpack.c.l.b16 %v565
      %v614 = vunpack.c.l.b16 %v566
      %v615 = vunpack.c.l.b16 %v567
      %v616 = vunpack.c.l.b16 %v568
      %v617 = vunpack.c.l.b16 %v569
      %v618 = vunpack.c.l.b16 %v570
      %v619 = vpack.c.b16 %v604, %v603
      %v620 = vpack.c.b16 %v606, %v605
      %v621 = vpack.c.b16 %v608, %v607
      %v622 = vpack.c.b16 %v610, %v609
      %v623 = vpack.c.b16 %v612, %v611
      %v624 = vpack.c.b16 %v614, %v613
      %v625 = vpack.c.b16 %v616, %v615
      %v626 = vpack.c.b16 %v618, %v617
      %635 = vmatprep.subr.bf16.mxu0 0
      %636 = vmatpush1.bf16.msra.mxu0 %v626
      %637 = vmatprep.subr.bf16.mxu0 0
      %638 = vmatpush1.bf16.msra.mxu0 %v625
      %639 = vmatprep.subr.bf16.mxu0 0
      %640 = vmatpush1.bf16.msra.mxu0 %v624
      %641 = vmatprep.subr.bf16.mxu0 0
      %642 = vmatpush1.bf16.msra.mxu0 %v623
      %643 = vmatprep.subr.bf16.mxu0 0
      %644 = vmatpush1.bf16.msra.mxu0 %v622
      %645 = vmatprep.subr.bf16.mxu0 0
      %646 = vmatpush1.bf16.msra.mxu0 %v621
      %647 = vmatprep.subr.bf16.mxu0 0
      %648 = vmatpush1.bf16.msra.mxu0 %v620
      %649 = vmatprep.subr.bf16.mxu0 0
      %650 = vmatpush1.bf16.msra.mxu0 %v619
      %651 = vmatprep.subr.bf16.mxu0 0
      %652 = vmatpush2.bf16.msra.mxu0 0
      %653 = vmatprep.subr.bf16.mxu0 0
      %654 = vmatpush2.bf16.msra.mxu0 0
      %655 = vmatprep.subr.bf16.mxu0 0
      %656 = vmatpush2.bf16.msra.mxu0 0
      %657 = vmatprep.subr.bf16.mxu0 0
      %658 = vmatpush2.bf16.msra.mxu0 0
      %659 = vmatprep.subr.bf16.mxu0 0
      %660 = vmatpush2.bf16.msra.mxu0 0
      %661 = vmatprep.subr.bf16.mxu0 0
      %662 = vmatpush2.bf16.msra.mxu0 0
      %663 = vmatprep.subr.bf16.mxu0 0
      %664 = vmatpush2.bf16.msra.mxu0 0
      %665 = vmatprep.subr.bf16.mxu0 0
      %666 = vmatpush2.bf16.msra.mxu0 0
      %667 = vmatprep.mubr.bf16.mxu0 0
      %668 = vmatmul.mubr.bf16.gmra.mxu0 %v542
      %v669 = vpop.f32.mrf.mxu0
      %v670 = vadd.f32 0.0, %v669
      %v671 = vpop.f32.mrf.mxu0
      %v672 = vpop.f32.mrf.mxu0
      %v673 = vadd.f32 0.0, %v672
      %v674 = vpop.f32.mrf.mxu0
      %675 = vmatprep.mubr.bf16.mxu0 0
      %676 = vmatmul.mubr.bf16.gmra.mxu0 %v543
      %v677 = vpop.f32.mrf.mxu0
      %v678 = vadd.f32 0.0, %v677
      %v679 = vpop.f32.mrf.mxu0
      %v680 = vpop.f32.mrf.mxu0
      %v681 = vadd.f32 0.0, %v680
      %v682 = vpop.f32.mrf.mxu0
      %683 = vmatprep.mubr.bf16.mxu0 0
      %684 = vmatmul.mubr.bf16.gmra.mxu0 %v544
      %v685 = vpop.f32.mrf.mxu0
      %v686 = vadd.f32 0.0, %v685
      %v687 = vpop.f32.mrf.mxu0
      %v688 = vpop.f32.mrf.mxu0
      %v689 = vadd.f32 0.0, %v688
      %v690 = vpop.f32.mrf.mxu0
      %691 = vmatprep.mubr.bf16.mxu0 0
      %692 = vmatmul.mubr.bf16.gmra.mxu0 %v545
      %v693 = vpop.f32.mrf.mxu0
      %v694 = vadd.f32 0.0, %v693
      %v695 = vpop.f32.mrf.mxu0
      %v696 = vpop.f32.mrf.mxu0
      %v697 = vadd.f32 0.0, %v696
      %v698 = vpop.f32.mrf.mxu0
      %699 = vmatprep.mubr.bf16.mxu0 0
      %700 = vmatmul.mubr.bf16.gmra.mxu0 %v546
      %v701 = vpop.f32.mrf.mxu0
      %v702 = vadd.f32 0.0, %v701
      %v703 = vpop.f32.mrf.mxu0
      %v704 = vpop.f32.mrf.mxu0
      %v705 = vadd.f32 0.0, %v704
      %v706 = vpop.f32.mrf.mxu0
      %707 = vmatprep.mubr.bf16.mxu0 0
      %708 = vmatmul.mubr.bf16.gmra.mxu0 %v547
      %v709 = vpop.f32.mrf.mxu0
      %v710 = vadd.f32 0.0, %v709
      %v711 = vpop.f32.mrf.mxu0
      %v712 = vpop.f32.mrf.mxu0
      %v713 = vadd.f32 0.0, %v712
      %v714 = vpop.f32.mrf.mxu0
      %715 = vmatprep.mubr.bf16.mxu0 0
      %716 = vmatmul.mubr.bf16.gmra.mxu0 %v548
      %v717 = vpop.f32.mrf.mxu0
      %v718 = vadd.f32 0.0, %v717
      %v719 = vpop.f32.mrf.mxu0
      %v720 = vpop.f32.mrf.mxu0
      %v721 = vadd.f32 0.0, %v720
      %v722 = vpop.f32.mrf.mxu0
      %723 = vmatprep.mubr.bf16.mxu0 0
      %724 = vmatmul.mubr.bf16.gmra.mxu0 %v549
      %v725 = vpop.f32.mrf.mxu0
      %v726 = vadd.f32 0.0, %v725
      %v727 = vpop.f32.mrf.mxu0
      %v728 = vpop.f32.mrf.mxu0
      %v729 = vadd.f32 0.0, %v728
      %v730 = vpop.f32.mrf.mxu0
      %731 = vdwg.mxu0
      %v732 = vadd.f32 %v571, %v670
      %v733 = vadd.f32 %v572, %v673
      %v734 = vadd.f32 %v573, %v678
      %v735 = vadd.f32 %v574, %v681
      %v736 = vadd.f32 %v575, %v686
      %v737 = vadd.f32 %v576, %v689
      %v738 = vadd.f32 %v577, %v694
      %v739 = vadd.f32 %v578, %v697
      %v740 = vadd.f32 %v579, %v702
      %v741 = vadd.f32 %v580, %v705
      %v742 = vadd.f32 %v581, %v710
      %v743 = vadd.f32 %v582, %v713
      %v744 = vadd.f32 %v583, %v718
      %v745 = vadd.f32 %v584, %v721
      %v746 = vadd.f32 %v585, %v726
      %v747 = vadd.f32 %v586, %v729
      %748 = vst [vmem:[#allocation2] sm:$0xff] %v732
      %749 = vst [vmem:[#allocation2 + $0x8] sm:$0xff] %v733
      %750 = vst [vmem:[#allocation2 + $0x10] sm:$0xff] %v734
      %751 = vst [vmem:[#allocation2 + $0x18] sm:$0xff] %v735
      %752 = vst [vmem:[#allocation2 + $0x20] sm:$0xff] %v736
      %753 = vst [vmem:[#allocation2 + $0x28] sm:$0xff] %v737
      %754 = vst [vmem:[#allocation2 + $0x30] sm:$0xff] %v738
      %755 = vst [vmem:[#allocation2 + $0x38] sm:$0xff] %v739
      %756 = vst [vmem:[#allocation2 + $0x40] sm:$0xff] %v740
      %757 = vst [vmem:[#allocation2 + $0x48] sm:$0xff] %v741
      %758 = vst [vmem:[#allocation2 + $0x50] sm:$0xff] %v742
      %759 = vst [vmem:[#allocation2 + $0x58] sm:$0xff] %v743
      %760 = vst [vmem:[#allocation2 + $0x60] sm:$0xff] %v744
      %761 = vst [vmem:[#allocation2 + $0x68] sm:$0xff] %v745
      %762 = vst [vmem:[#allocation2 + $0x70] sm:$0xff] %v746
      %763 = vst [vmem:[#allocation2 + $0x78] sm:$0xff] %v747
      %p764 = scmp.eq.s32.totalorder %s29, 2
      // Predicated region
      $region77: #{_edge_aggr_padded.1} parent=71 // pred_check
        %p765 = pneg %p764
      $region78: #{_edge_aggr_padded.1} parent=71 // pred_check_branch
        %767 = sbr.rel (%p765) target = $region80
      $region79: #{_edge_aggr_padded.1} parent=71 // pred_region
        %v768 = vld [vmem:[#allocation2] sm:$0xff]
        %v769 = vld [vmem:[#allocation2 + $0x8] sm:$0xff]
        %v770 = vld [vmem:[#allocation2 + $0x10] sm:$0xff]
        %v771 = vld [vmem:[#allocation2 + $0x18] sm:$0xff]
        %v772 = vld [vmem:[#allocation2 + $0x20] sm:$0xff]
        %v773 = vld [vmem:[#allocation2 + $0x28] sm:$0xff]
        %v774 = vld [vmem:[#allocation2 + $0x30] sm:$0xff]
        %v775 = vld [vmem:[#allocation2 + $0x38] sm:$0xff]
        %v776 = vld [vmem:[#allocation2 + $0x40] sm:$0xff]
        %v777 = vld [vmem:[#allocation2 + $0x48] sm:$0xff]
        %v778 = vld [vmem:[#allocation2 + $0x50] sm:$0xff]
        %v779 = vld [vmem:[#allocation2 + $0x58] sm:$0xff]
        %v780 = vld [vmem:[#allocation2 + $0x60] sm:$0xff]
        %v781 = vld [vmem:[#allocation2 + $0x68] sm:$0xff]
        %v782 = vld [vmem:[#allocation2 + $0x70] sm:$0xff]
        %v783 = vld [vmem:[#allocation2 + $0x78] sm:$0xff]
        %v784 = vld [vmem:[%s2] sm:$0x1]
        %v786 = vlaneseq
        %v787 = vshrl.u32 %v786, 7
        %v788 = vsub.s32 0, %v787
        %v789 = vrot.slane %v784, %v788
        %v791 = vadd.f32 %v768, %v789
        %v792 = vadd.f32 %v769, %v789
        %v793 = vadd.f32 %v770, %v789
        %v794 = vadd.f32 %v771, %v789
        %v795 = vadd.f32 %v772, %v789
        %v796 = vadd.f32 %v773, %v789
        %v797 = vadd.f32 %v774, %v789
        %v798 = vadd.f32 %v775, %v789
        %v799 = vadd.f32 %v776, %v789
        %v800 = vadd.f32 %v777, %v789
        %v801 = vadd.f32 %v778, %v789
        %v802 = vadd.f32 %v779, %v789
        %v803 = vadd.f32 %v780, %v789
        %v804 = vadd.f32 %v781, %v789
        %v805 = vadd.f32 %v782, %v789
        %v806 = vadd.f32 %v783, %v789
        %v807 = vpack.c.bf16 %v792, %v791
        %v808 = vpack.c.bf16 %v794, %v793
        %v809 = vpack.c.bf16 %v796, %v795
        %v810 = vpack.c.bf16 %v798, %v797
        %v811 = vpack.c.bf16 %v800, %v799
        %v812 = vpack.c.bf16 %v802, %v801
        %v813 = vpack.c.bf16 %v804, %v803
        %v814 = vpack.c.bf16 %v806, %v805
        %v815 = vld [vmem:[%s3] sm:$0xf]
        %v816 = vld [vmem:[%s3 + $0x4] sm:$0xf]
        %v817 = vld [vmem:[%s3 + $0x8] sm:$0xf]
        %v818 = vld [vmem:[%s3 + $0xc] sm:$0xf]
        %v819 = vld [vmem:[%s3 + $0x10] sm:$0xf]
        %v820 = vld [vmem:[%s3 + $0x14] sm:$0xf]
        %v821 = vld [vmem:[%s3 + $0x18] sm:$0xf]
        %v822 = vld [vmem:[%s3 + $0x1c] sm:$0xf]
        %v823 = vld [vmem:[%s3 + $0x20] sm:$0xf]
        %v824 = vld [vmem:[%s3 + $0x24] sm:$0xf]
        %v825 = vld [vmem:[%s3 + $0x28] sm:$0xf]
        %v826 = vld [vmem:[%s3 + $0x2c] sm:$0xf]
        %v827 = vld [vmem:[%s3 + $0x30] sm:$0xf]
        %v828 = vld [vmem:[%s3 + $0x34] sm:$0xf]
        %v829 = vld [vmem:[%s3 + $0x38] sm:$0xf]
        %v830 = vld [vmem:[%s3 + $0x3c] sm:$0xf]
        %v831 = vld [vmem:[%s4] sm:$0x1]
        %v833 = vlaneseq
        %v834 = vshrl.u32 %v833, 7
        %v835 = vsub.s32 0, %v834
        %v836 = vrot.slane %v831, %v835
        %v854 = vunpack.c.l.b16 %v815
        %v855 = vunpack.c.l.b16 %v816
        %v856 = vunpack.c.l.b16 %v817
        %v857 = vunpack.c.l.b16 %v818
        %v858 = vunpack.c.l.b16 %v819
        %v859 = vunpack.c.l.b16 %v820
        %v860 = vunpack.c.l.b16 %v821
        %v861 = vunpack.c.l.b16 %v822
        %v862 = vunpack.c.l.b16 %v823
        %v863 = vunpack.c.l.b16 %v824
        %v864 = vunpack.c.l.b16 %v825
        %v865 = vunpack.c.l.b16 %v826
        %v866 = vunpack.c.l.b16 %v827
        %v867 = vunpack.c.l.b16 %v828
        %v868 = vunpack.c.l.b16 %v829
        %v869 = vunpack.c.l.b16 %v830
        %v870 = vpack.c.b16 %v855, %v854
        %v871 = vpack.c.b16 %v857, %v856
        %v872 = vpack.c.b16 %v859, %v858
        %v873 = vpack.c.b16 %v861, %v860
        %v874 = vpack.c.b16 %v863, %v862
        %v875 = vpack.c.b16 %v865, %v864
        %v876 = vpack.c.b16 %v867, %v866
        %v877 = vpack.c.b16 %v869, %v868
        %886 = vmatprep.subr.bf16.mxu0 0
        %887 = vmatpush1.bf16.msra.mxu0 %v877
        %888 = vmatprep.subr.bf16.mxu0 0
        %889 = vmatpush1.bf16.msra.mxu0 %v876
        %890 = vmatprep.subr.bf16.mxu0 0
        %891 = vmatpush1.bf16.msra.mxu0 %v875
        %892 = vmatprep.subr.bf16.mxu0 0
        %893 = vmatpush1.bf16.msra.mxu0 %v874
        %894 = vmatprep.subr.bf16.mxu0 0
        %895 = vmatpush1.bf16.msra.mxu0 %v873
        %896 = vmatprep.subr.bf16.mxu0 0
        %897 = vmatpush1.bf16.msra.mxu0 %v872
        %898 = vmatprep.subr.bf16.mxu0 0
        %899 = vmatpush1.bf16.msra.mxu0 %v871
        %900 = vmatprep.subr.bf16.mxu0 0
        %901 = vmatpush1.bf16.msra.mxu0 %v870
        %902 = vmatprep.subr.bf16.mxu0 0
        %903 = vmatpush2.bf16.msra.mxu0 0
        %904 = vmatprep.subr.bf16.mxu0 0
        %905 = vmatpush2.bf16.msra.mxu0 0
        %906 = vmatprep.subr.bf16.mxu0 0
        %907 = vmatpush2.bf16.msra.mxu0 0
        %908 = vmatprep.subr.bf16.mxu0 0
        %909 = vmatpush2.bf16.msra.mxu0 0
        %910 = vmatprep.subr.bf16.mxu0 0
        %911 = vmatpush2.bf16.msra.mxu0 0
        %912 = vmatprep.subr.bf16.mxu0 0
        %913 = vmatpush2.bf16.msra.mxu0 0
        %914 = vmatprep.subr.bf16.mxu0 0
        %915 = vmatpush2.bf16.msra.mxu0 0
        %916 = vmatprep.subr.bf16.mxu0 0
        %917 = vmatpush2.bf16.msra.mxu0 0
        %918 = vmatprep.mubr.bf16.mxu0 0
        %919 = vmatmul.mubr.bf16.gmra.mxu0 %v807
        %v920 = vpop.f32.mrf.mxu0
        %v921 = vadd.f32 %v836, %v920
        %v922 = vpop.f32.mrf.mxu0
        %v923 = vpop.f32.mrf.mxu0
        %v924 = vadd.f32 %v836, %v923
        %v925 = vpop.f32.mrf.mxu0
        %926 = vmatprep.mubr.bf16.mxu0 0
        %927 = vmatmul.mubr.bf16.gmra.mxu0 %v808
        %v928 = vpop.f32.mrf.mxu0
        %v929 = vadd.f32 %v836, %v928
        %v930 = vpop.f32.mrf.mxu0
        %v931 = vpop.f32.mrf.mxu0
        %v932 = vadd.f32 %v836, %v931
        %v933 = vpop.f32.mrf.mxu0
        %934 = vmatprep.mubr.bf16.mxu0 0
        %935 = vmatmul.mubr.bf16.gmra.mxu0 %v809
        %v936 = vpop.f32.mrf.mxu0
        %v937 = vadd.f32 %v836, %v936
        %v938 = vpop.f32.mrf.mxu0
        %v939 = vpop.f32.mrf.mxu0
        %v940 = vadd.f32 %v836, %v939
        %v941 = vpop.f32.mrf.mxu0
        %942 = vmatprep.mubr.bf16.mxu0 0
        %943 = vmatmul.mubr.bf16.gmra.mxu0 %v810
        %v944 = vpop.f32.mrf.mxu0
        %v945 = vadd.f32 %v836, %v944
        %v946 = vpop.f32.mrf.mxu0
        %v947 = vpop.f32.mrf.mxu0
        %v948 = vadd.f32 %v836, %v947
        %v949 = vpop.f32.mrf.mxu0
        %950 = vmatprep.mubr.bf16.mxu0 0
        %951 = vmatmul.mubr.bf16.gmra.mxu0 %v811
        %v952 = vpop.f32.mrf.mxu0
        %v953 = vadd.f32 %v836, %v952
        %v954 = vpop.f32.mrf.mxu0
        %v955 = vpop.f32.mrf.mxu0
        %v956 = vadd.f32 %v836, %v955
        %v957 = vpop.f32.mrf.mxu0
        %958 = vmatprep.mubr.bf16.mxu0 0
        %959 = vmatmul.mubr.bf16.gmra.mxu0 %v812
        %v960 = vpop.f32.mrf.mxu0
        %v961 = vadd.f32 %v836, %v960
        %v962 = vpop.f32.mrf.mxu0
        %v963 = vpop.f32.mrf.mxu0
        %v964 = vadd.f32 %v836, %v963
        %v965 = vpop.f32.mrf.mxu0
        %966 = vmatprep.mubr.bf16.mxu0 0
        %967 = vmatmul.mubr.bf16.gmra.mxu0 %v813
        %v968 = vpop.f32.mrf.mxu0
        %v969 = vadd.f32 %v836, %v968
        %v970 = vpop.f32.mrf.mxu0
        %v971 = vpop.f32.mrf.mxu0
        %v972 = vadd.f32 %v836, %v971
        %v973 = vpop.f32.mrf.mxu0
        %974 = vmatprep.mubr.bf16.mxu0 0
        %975 = vmatmul.mubr.bf16.gmra.mxu0 %v814
        %v976 = vpop.f32.mrf.mxu0
        %v977 = vadd.f32 %v836, %v976
        %v978 = vpop.f32.mrf.mxu0
        %v979 = vpop.f32.mrf.mxu0
        %v980 = vadd.f32 %v836, %v979
        %v981 = vpop.f32.mrf.mxu0
        %982 = vdwg.mxu0
        %v983 = vld [vmem:[%s5] sm:$0x1]
        %v984 = vld [vmem:[%s6] sm:$0x1]
        %985 = vadd.xlane.f32.xlu0 %v921
        %v986 = vpop.xlane.xlu0 %985
        %987 = vadd.xlane.f32.xlu0 %v924
        %v988 = vpop.xlane.xlu0 %987
        %989 = vadd.xlane.f32.xlu0 %v929
        %v990 = vpop.xlane.xlu0 %989
        %991 = vadd.xlane.f32.xlu0 %v932
        %v992 = vpop.xlane.xlu0 %991
        %993 = vadd.xlane.f32.xlu0 %v937
        %v994 = vpop.xlane.xlu0 %993
        %995 = vadd.xlane.f32.xlu0 %v940
        %v996 = vpop.xlane.xlu0 %995
        %997 = vadd.xlane.f32.xlu0 %v945
        %v998 = vpop.xlane.xlu0 %997
        %999 = vadd.xlane.f32.xlu0 %v948
        %v1000 = vpop.xlane.xlu0 %999
        %1001 = vadd.xlane.f32.xlu0 %v953
        %v1002 = vpop.xlane.xlu0 %1001
        %1003 = vadd.xlane.f32.xlu0 %v956
        %v1004 = vpop.xlane.xlu0 %1003
        %1005 = vadd.xlane.f32.xlu0 %v961
        %v1006 = vpop.xlane.xlu0 %1005
        %1007 = vadd.xlane.f32.xlu0 %v964
        %v1008 = vpop.xlane.xlu0 %1007
        %1009 = vadd.xlane.f32.xlu0 %v969
        %v1010 = vpop.xlane.xlu0 %1009
        %1011 = vadd.xlane.f32.xlu0 %v972
        %v1012 = vpop.xlane.xlu0 %1011
        %1013 = vadd.xlane.f32.xlu0 %v977
        %v1014 = vpop.xlane.xlu0 %1013
        %1015 = vadd.xlane.f32.xlu0 %v980
        %v1016 = vpop.xlane.xlu0 %1015
        %v1017 = vrcp.pop 128.0
        %v1018 = vmul.f32 %v986, %v1017
        %v1019 = vmul.f32 %v988, %v1017
        %v1020 = vmul.f32 %v990, %v1017
        %v1021 = vmul.f32 %v992, %v1017
        %v1022 = vmul.f32 %v994, %v1017
        %v1023 = vmul.f32 %v996, %v1017
        %v1024 = vmul.f32 %v998, %v1017
        %v1025 = vmul.f32 %v1000, %v1017
        %v1026 = vmul.f32 %v1002, %v1017
        %v1027 = vmul.f32 %v1004, %v1017
        %v1028 = vmul.f32 %v1006, %v1017
        %v1029 = vmul.f32 %v1008, %v1017
        %v1030 = vmul.f32 %v1010, %v1017
        %v1031 = vmul.f32 %v1012, %v1017
        %v1032 = vmul.f32 %v1014, %v1017
        %v1033 = vmul.f32 %v1016, %v1017
        %v1034 = vsub.f32 %v921, %v1018
        %v1035 = vsub.f32 %v924, %v1019
        %v1036 = vsub.f32 %v929, %v1020
        %v1037 = vsub.f32 %v932, %v1021
        %v1038 = vsub.f32 %v937, %v1022
        %v1039 = vsub.f32 %v940, %v1023
        %v1040 = vsub.f32 %v945, %v1024
        %v1041 = vsub.f32 %v948, %v1025
        %v1042 = vsub.f32 %v953, %v1026
        %v1043 = vsub.f32 %v956, %v1027
        %v1044 = vsub.f32 %v961, %v1028
        %v1045 = vsub.f32 %v964, %v1029
        %v1046 = vsub.f32 %v969, %v1030
        %v1047 = vsub.f32 %v972, %v1031
        %v1048 = vsub.f32 %v977, %v1032
        %v1049 = vsub.f32 %v980, %v1033
        %v1050 = vmul.f32 %v1034, %v1034
        %v1051 = vmul.f32 %v1035, %v1035
        %v1052 = vmul.f32 %v1036, %v1036
        %v1053 = vmul.f32 %v1037, %v1037
        %v1054 = vmul.f32 %v1038, %v1038
        %v1055 = vmul.f32 %v1039, %v1039
        %v1056 = vmul.f32 %v1040, %v1040
        %v1057 = vmul.f32 %v1041, %v1041
        %v1058 = vmul.f32 %v1042, %v1042
        %v1059 = vmul.f32 %v1043, %v1043
        %v1060 = vmul.f32 %v1044, %v1044
        %v1061 = vmul.f32 %v1045, %v1045
        %v1062 = vmul.f32 %v1046, %v1046
        %v1063 = vmul.f32 %v1047, %v1047
        %v1064 = vmul.f32 %v1048, %v1048
        %v1065 = vmul.f32 %v1049, %v1049
        %1066 = vadd.xlane.f32.xlu0 %v1050
        %v1067 = vpop.xlane.xlu0 %1066
        %1068 = vadd.xlane.f32.xlu0 %v1051
        %v1069 = vpop.xlane.xlu0 %1068
        %1070 = vadd.xlane.f32.xlu0 %v1052
        %v1071 = vpop.xlane.xlu0 %1070
        %1072 = vadd.xlane.f32.xlu0 %v1053
        %v1073 = vpop.xlane.xlu0 %1072
        %1074 = vadd.xlane.f32.xlu0 %v1054
        %v1075 = vpop.xlane.xlu0 %1074
        %1076 = vadd.xlane.f32.xlu0 %v1055
        %v1077 = vpop.xlane.xlu0 %1076
        %1078 = vadd.xlane.f32.xlu0 %v1056
        %v1079 = vpop.xlane.xlu0 %1078
        %1080 = vadd.xlane.f32.xlu0 %v1057
        %v1081 = vpop.xlane.xlu0 %1080
        %1082 = vadd.xlane.f32.xlu0 %v1058
        %v1083 = vpop.xlane.xlu0 %1082
        %1084 = vadd.xlane.f32.xlu0 %v1059
        %v1085 = vpop.xlane.xlu0 %1084
        %1086 = vadd.xlane.f32.xlu0 %v1060
        %v1087 = vpop.xlane.xlu0 %1086
        %1088 = vadd.xlane.f32.xlu0 %v1061
        %v1089 = vpop.xlane.xlu0 %1088
        %1090 = vadd.xlane.f32.xlu0 %v1062
        %v1091 = vpop.xlane.xlu0 %1090
        %1092 = vadd.xlane.f32.xlu0 %v1063
        %v1093 = vpop.xlane.xlu0 %1092
        %1094 = vadd.xlane.f32.xlu0 %v1064
        %v1095 = vpop.xlane.xlu0 %1094
        %1096 = vadd.xlane.f32.xlu0 %v1065
        %v1097 = vpop.xlane.xlu0 %1096
        %v1098 = vmul.f32 %v1067, %v1017
        %v1099 = vmul.f32 %v1069, %v1017
        %v1100 = vmul.f32 %v1071, %v1017
        %v1101 = vmul.f32 %v1073, %v1017
        %v1102 = vmul.f32 %v1075, %v1017
        %v1103 = vmul.f32 %v1077, %v1017
        %v1104 = vmul.f32 %v1079, %v1017
        %v1105 = vmul.f32 %v1081, %v1017
        %v1106 = vmul.f32 %v1083, %v1017
        %v1107 = vmul.f32 %v1085, %v1017
        %v1108 = vmul.f32 %v1087, %v1017
        %v1109 = vmul.f32 %v1089, %v1017
        %v1110 = vmul.f32 %v1091, %v1017
        %v1111 = vmul.f32 %v1093, %v1017
        %v1112 = vmul.f32 %v1095, %v1017
        %v1113 = vmul.f32 %v1097, %v1017
        %v1114 = vadd.f32 %v1098, 1e-05
        %v1115 = vadd.f32 %v1099, 1e-05
        %v1116 = vadd.f32 %v1100, 1e-05
        %v1117 = vadd.f32 %v1101, 1e-05
        %v1118 = vadd.f32 %v1102, 1e-05
        %v1119 = vadd.f32 %v1103, 1e-05
        %v1120 = vadd.f32 %v1104, 1e-05
        %v1121 = vadd.f32 %v1105, 1e-05
        %v1122 = vadd.f32 %v1106, 1e-05
        %v1123 = vadd.f32 %v1107, 1e-05
        %v1124 = vadd.f32 %v1108, 1e-05
        %v1125 = vadd.f32 %v1109, 1e-05
        %v1126 = vadd.f32 %v1110, 1e-05
        %v1127 = vadd.f32 %v1111, 1e-05
        %v1128 = vadd.f32 %v1112, 1e-05
        %v1129 = vadd.f32 %v1113, 1e-05
        %v1130 = vrsqrt.pop %v1114
        %v1131 = vrsqrt.pop %v1115
        %v1132 = vrsqrt.pop %v1116
        %v1133 = vrsqrt.pop %v1117
        %v1134 = vrsqrt.pop %v1118
        %v1135 = vrsqrt.pop %v1119
        %v1136 = vrsqrt.pop %v1120
        %v1137 = vrsqrt.pop %v1121
        %v1138 = vrsqrt.pop %v1122
        %v1139 = vrsqrt.pop %v1123
        %v1140 = vrsqrt.pop %v1124
        %v1141 = vrsqrt.pop %v1125
        %v1142 = vrsqrt.pop %v1126
        %v1143 = vrsqrt.pop %v1127
        %v1144 = vrsqrt.pop %v1128
        %v1145 = vrsqrt.pop %v1129
        %v1146 = vmul.f32 %v1034, %v1130
        %v1147 = vmul.f32 %v1035, %v1131
        %v1148 = vmul.f32 %v1036, %v1132
        %v1149 = vmul.f32 %v1037, %v1133
        %v1150 = vmul.f32 %v1038, %v1134
        %v1151 = vmul.f32 %v1039, %v1135
        %v1152 = vmul.f32 %v1040, %v1136
        %v1153 = vmul.f32 %v1041, %v1137
        %v1154 = vmul.f32 %v1042, %v1138
        %v1155 = vmul.f32 %v1043, %v1139
        %v1156 = vmul.f32 %v1044, %v1140
        %v1157 = vmul.f32 %v1045, %v1141
        %v1158 = vmul.f32 %v1046, %v1142
        %v1159 = vmul.f32 %v1047, %v1143
        %v1160 = vmul.f32 %v1048, %v1144
        %v1161 = vmul.f32 %v1049, %v1145
        %v1163 = vlaneseq
        %v1164 = vshrl.u32 %v1163, 7
        %v1165 = vsub.s32 0, %v1164
        %v1166 = vrot.slane %v983, %v1165
        %v1168 = vmul.f32 %v1146, %v1166
        %v1169 = vmul.f32 %v1147, %v1166
        %v1170 = vmul.f32 %v1148, %v1166
        %v1171 = vmul.f32 %v1149, %v1166
        %v1172 = vmul.f32 %v1150, %v1166
        %v1173 = vmul.f32 %v1151, %v1166
        %v1174 = vmul.f32 %v1152, %v1166
        %v1175 = vmul.f32 %v1153, %v1166
        %v1176 = vmul.f32 %v1154, %v1166
        %v1177 = vmul.f32 %v1155, %v1166
        %v1178 = vmul.f32 %v1156, %v1166
        %v1179 = vmul.f32 %v1157, %v1166
        %v1180 = vmul.f32 %v1158, %v1166
        %v1181 = vmul.f32 %v1159, %v1166
        %v1182 = vmul.f32 %v1160, %v1166
        %v1183 = vmul.f32 %v1161, %v1166
        %v1185 = vlaneseq
        %v1186 = vshrl.u32 %v1185, 7
        %v1187 = vsub.s32 0, %v1186
        %v1188 = vrot.slane %v984, %v1187
        %v1190 = vadd.f32 %v1168, %v1188
        %v1191 = vadd.f32 %v1169, %v1188
        %v1192 = vadd.f32 %v1170, %v1188
        %v1193 = vadd.f32 %v1171, %v1188
        %v1194 = vadd.f32 %v1172, %v1188
        %v1195 = vadd.f32 %v1173, %v1188
        %v1196 = vadd.f32 %v1174, %v1188
        %v1197 = vadd.f32 %v1175, %v1188
        %v1198 = vadd.f32 %v1176, %v1188
        %v1199 = vadd.f32 %v1177, %v1188
        %v1200 = vadd.f32 %v1178, %v1188
        %v1201 = vadd.f32 %v1179, %v1188
        %v1202 = vadd.f32 %v1180, %v1188
        %v1203 = vadd.f32 %v1181, %v1188
        %v1204 = vadd.f32 %v1182, %v1188
        %v1205 = vadd.f32 %v1183, %v1188
        %v1206 = vmax.f32 %v1190, 0.0
        %v1207 = vmax.f32 %v1191, 0.0
        %v1208 = vmax.f32 %v1192, 0.0
        %v1209 = vmax.f32 %v1193, 0.0
        %v1210 = vmax.f32 %v1194, 0.0
        %v1211 = vmax.f32 %v1195, 0.0
        %v1212 = vmax.f32 %v1196, 0.0
        %v1213 = vmax.f32 %v1197, 0.0
        %v1214 = vmax.f32 %v1198, 0.0
        %v1215 = vmax.f32 %v1199, 0.0
        %v1216 = vmax.f32 %v1200, 0.0
        %v1217 = vmax.f32 %v1201, 0.0
        %v1218 = vmax.f32 %v1202, 0.0
        %v1219 = vmax.f32 %v1203, 0.0
        %v1220 = vmax.f32 %v1204, 0.0
        %v1221 = vmax.f32 %v1205, 0.0
        %v1222 = vpack.c.bf16 %v1207, %v1206
        %v1223 = vpack.c.bf16 %v1209, %v1208
        %v1224 = vpack.c.bf16 %v1211, %v1210
        %v1225 = vpack.c.bf16 %v1213, %v1212
        %v1226 = vpack.c.bf16 %v1215, %v1214
        %v1227 = vpack.c.bf16 %v1217, %v1216
        %v1228 = vpack.c.bf16 %v1219, %v1218
        %v1229 = vpack.c.bf16 %v1221, %v1220
        %v1230 = vld [vmem:[%s7] sm:$0xf]
        %v1231 = vld [vmem:[%s7 + $0x4] sm:$0xf]
        %v1232 = vld [vmem:[%s7 + $0x8] sm:$0xf]
        %v1233 = vld [vmem:[%s7 + $0xc] sm:$0xf]
        %v1234 = vld [vmem:[%s7 + $0x10] sm:$0xf]
        %v1235 = vld [vmem:[%s7 + $0x14] sm:$0xf]
        %v1236 = vld [vmem:[%s7 + $0x18] sm:$0xf]
        %v1237 = vld [vmem:[%s7 + $0x1c] sm:$0xf]
        %v1238 = vld [vmem:[%s7 + $0x20] sm:$0xf]
        %v1239 = vld [vmem:[%s7 + $0x24] sm:$0xf]
        %v1240 = vld [vmem:[%s7 + $0x28] sm:$0xf]
        %v1241 = vld [vmem:[%s7 + $0x2c] sm:$0xf]
        %v1242 = vld [vmem:[%s7 + $0x30] sm:$0xf]
        %v1243 = vld [vmem:[%s7 + $0x34] sm:$0xf]
        %v1244 = vld [vmem:[%s7 + $0x38] sm:$0xf]
        %v1245 = vld [vmem:[%s7 + $0x3c] sm:$0xf]
        %v1246 = vld [vmem:[%s8] sm:$0x1]
        %v1248 = vlaneseq
        %v1249 = vshrl.u32 %v1248, 7
        %v1250 = vsub.s32 0, %v1249
        %v1251 = vrot.slane %v1246, %v1250
        %v1269 = vunpack.c.l.b16 %v1230
        %v1270 = vunpack.c.l.b16 %v1231
        %v1271 = vunpack.c.l.b16 %v1232
        %v1272 = vunpack.c.l.b16 %v1233
        %v1273 = vunpack.c.l.b16 %v1234
        %v1274 = vunpack.c.l.b16 %v1235
        %v1275 = vunpack.c.l.b16 %v1236
        %v1276 = vunpack.c.l.b16 %v1237
        %v1277 = vunpack.c.l.b16 %v1238
        %v1278 = vunpack.c.l.b16 %v1239
        %v1279 = vunpack.c.l.b16 %v1240
        %v1280 = vunpack.c.l.b16 %v1241
        %v1281 = vunpack.c.l.b16 %v1242
        %v1282 = vunpack.c.l.b16 %v1243
        %v1283 = vunpack.c.l.b16 %v1244
        %v1284 = vunpack.c.l.b16 %v1245
        %v1285 = vpack.c.b16 %v1270, %v1269
        %v1286 = vpack.c.b16 %v1272, %v1271
        %v1287 = vpack.c.b16 %v1274, %v1273
        %v1288 = vpack.c.b16 %v1276, %v1275
        %v1289 = vpack.c.b16 %v1278, %v1277
        %v1290 = vpack.c.b16 %v1280, %v1279
        %v1291 = vpack.c.b16 %v1282, %v1281
        %v1292 = vpack.c.b16 %v1284, %v1283
        %1301 = vmatprep.subr.bf16.mxu0 0
        %1302 = vmatpush1.bf16.msra.mxu0 %v1292
        %1303 = vmatprep.subr.bf16.mxu0 0
        %1304 = vmatpush1.bf16.msra.mxu0 %v1291
        %1305 = vmatprep.subr.bf16.mxu0 0
        %1306 = vmatpush1.bf16.msra.mxu0 %v1290
        %1307 = vmatprep.subr.bf16.mxu0 0
        %1308 = vmatpush1.bf16.msra.mxu0 %v1289
        %1309 = vmatprep.subr.bf16.mxu0 0
        %1310 = vmatpush1.bf16.msra.mxu0 %v1288
        %1311 = vmatprep.subr.bf16.mxu0 0
        %1312 = vmatpush1.bf16.msra.mxu0 %v1287
        %1313 = vmatprep.subr.bf16.mxu0 0
        %1314 = vmatpush1.bf16.msra.mxu0 %v1286
        %1315 = vmatprep.subr.bf16.mxu0 0
        %1316 = vmatpush1.bf16.msra.mxu0 %v1285
        %1317 = vmatprep.subr.bf16.mxu0 0
        %1318 = vmatpush2.bf16.msra.mxu0 0
        %1319 = vmatprep.subr.bf16.mxu0 0
        %1320 = vmatpush2.bf16.msra.mxu0 0
        %1321 = vmatprep.subr.bf16.mxu0 0
        %1322 = vmatpush2.bf16.msra.mxu0 0
        %1323 = vmatprep.subr.bf16.mxu0 0
        %1324 = vmatpush2.bf16.msra.mxu0 0
        %1325 = vmatprep.subr.bf16.mxu0 0
        %1326 = vmatpush2.bf16.msra.mxu0 0
        %1327 = vmatprep.subr.bf16.mxu0 0
        %1328 = vmatpush2.bf16.msra.mxu0 0
        %1329 = vmatprep.subr.bf16.mxu0 0
        %1330 = vmatpush2.bf16.msra.mxu0 0
        %1331 = vmatprep.subr.bf16.mxu0 0
        %1332 = vmatpush2.bf16.msra.mxu0 0
        %1333 = vmatprep.mubr.bf16.mxu0 0
        %1334 = vmatmul.mubr.bf16.gmra.mxu0 %v1222
        %v1335 = vpop.f32.mrf.mxu0
        %v1336 = vadd.f32 %v1251, %v1335
        %v1337 = vpop.f32.mrf.mxu0
        %v1338 = vpop.f32.mrf.mxu0
        %v1339 = vadd.f32 %v1251, %v1338
        %v1340 = vpop.f32.mrf.mxu0
        %1341 = vmatprep.mubr.bf16.mxu0 0
        %1342 = vmatmul.mubr.bf16.gmra.mxu0 %v1223
        %v1343 = vpop.f32.mrf.mxu0
        %v1344 = vadd.f32 %v1251, %v1343
        %v1345 = vpop.f32.mrf.mxu0
        %v1346 = vpop.f32.mrf.mxu0
        %v1347 = vadd.f32 %v1251, %v1346
        %v1348 = vpop.f32.mrf.mxu0
        %1349 = vmatprep.mubr.bf16.mxu0 0
        %1350 = vmatmul.mubr.bf16.gmra.mxu0 %v1224
        %v1351 = vpop.f32.mrf.mxu0
        %v1352 = vadd.f32 %v1251, %v1351
        %v1353 = vpop.f32.mrf.mxu0
        %v1354 = vpop.f32.mrf.mxu0
        %v1355 = vadd.f32 %v1251, %v1354
        %v1356 = vpop.f32.mrf.mxu0
        %1357 = vmatprep.mubr.bf16.mxu0 0
        %1358 = vmatmul.mubr.bf16.gmra.mxu0 %v1225
        %v1359 = vpop.f32.mrf.mxu0
        %v1360 = vadd.f32 %v1251, %v1359
        %v1361 = vpop.f32.mrf.mxu0
        %v1362 = vpop.f32.mrf.mxu0
        %v1363 = vadd.f32 %v1251, %v1362
        %v1364 = vpop.f32.mrf.mxu0
        %1365 = vmatprep.mubr.bf16.mxu0 0
        %1366 = vmatmul.mubr.bf16.gmra.mxu0 %v1226
        %v1367 = vpop.f32.mrf.mxu0
        %v1368 = vadd.f32 %v1251, %v1367
        %v1369 = vpop.f32.mrf.mxu0
        %v1370 = vpop.f32.mrf.mxu0
        %v1371 = vadd.f32 %v1251, %v1370
        %v1372 = vpop.f32.mrf.mxu0
        %1373 = vmatprep.mubr.bf16.mxu0 0
        %1374 = vmatmul.mubr.bf16.gmra.mxu0 %v1227
        %v1375 = vpop.f32.mrf.mxu0
        %v1376 = vadd.f32 %v1251, %v1375
        %v1377 = vpop.f32.mrf.mxu0
        %v1378 = vpop.f32.mrf.mxu0
        %v1379 = vadd.f32 %v1251, %v1378
        %v1380 = vpop.f32.mrf.mxu0
        %1381 = vmatprep.mubr.bf16.mxu0 0
        %1382 = vmatmul.mubr.bf16.gmra.mxu0 %v1228
        %v1383 = vpop.f32.mrf.mxu0
        %v1384 = vadd.f32 %v1251, %v1383
        %v1385 = vpop.f32.mrf.mxu0
        %v1386 = vpop.f32.mrf.mxu0
        %v1387 = vadd.f32 %v1251, %v1386
        %v1388 = vpop.f32.mrf.mxu0
        %1389 = vmatprep.mubr.bf16.mxu0 0
        %1390 = vmatmul.mubr.bf16.gmra.mxu0 %v1229
        %v1391 = vpop.f32.mrf.mxu0
        %v1392 = vadd.f32 %v1251, %v1391
        %v1393 = vpop.f32.mrf.mxu0
        %v1394 = vpop.f32.mrf.mxu0
        %v1395 = vadd.f32 %v1251, %v1394
        %v1396 = vpop.f32.mrf.mxu0
        %1397 = vdwg.mxu0
        %v1398 = vld [vmem:[%s9] sm:$0x1]
        %v1399 = vld [vmem:[%s10] sm:$0x1]
        %1400 = vadd.xlane.f32.xlu0 %v1336
        %v1401 = vpop.xlane.xlu0 %1400
        %1402 = vadd.xlane.f32.xlu0 %v1339
        %v1403 = vpop.xlane.xlu0 %1402
        %1404 = vadd.xlane.f32.xlu0 %v1344
        %v1405 = vpop.xlane.xlu0 %1404
        %1406 = vadd.xlane.f32.xlu0 %v1347
        %v1407 = vpop.xlane.xlu0 %1406
        %1408 = vadd.xlane.f32.xlu0 %v1352
        %v1409 = vpop.xlane.xlu0 %1408
        %1410 = vadd.xlane.f32.xlu0 %v1355
        %v1411 = vpop.xlane.xlu0 %1410
        %1412 = vadd.xlane.f32.xlu0 %v1360
        %v1413 = vpop.xlane.xlu0 %1412
        %1414 = vadd.xlane.f32.xlu0 %v1363
        %v1415 = vpop.xlane.xlu0 %1414
        %1416 = vadd.xlane.f32.xlu0 %v1368
        %v1417 = vpop.xlane.xlu0 %1416
        %1418 = vadd.xlane.f32.xlu0 %v1371
        %v1419 = vpop.xlane.xlu0 %1418
        %1420 = vadd.xlane.f32.xlu0 %v1376
        %v1421 = vpop.xlane.xlu0 %1420
        %1422 = vadd.xlane.f32.xlu0 %v1379
        %v1423 = vpop.xlane.xlu0 %1422
        %1424 = vadd.xlane.f32.xlu0 %v1384
        %v1425 = vpop.xlane.xlu0 %1424
        %1426 = vadd.xlane.f32.xlu0 %v1387
        %v1427 = vpop.xlane.xlu0 %1426
        %1428 = vadd.xlane.f32.xlu0 %v1392
        %v1429 = vpop.xlane.xlu0 %1428
        %1430 = vadd.xlane.f32.xlu0 %v1395
        %v1431 = vpop.xlane.xlu0 %1430
        %v1432 = vmul.f32 %v1401, %v1017
        %v1433 = vmul.f32 %v1403, %v1017
        %v1434 = vmul.f32 %v1405, %v1017
        %v1435 = vmul.f32 %v1407, %v1017
        %v1436 = vmul.f32 %v1409, %v1017
        %v1437 = vmul.f32 %v1411, %v1017
        %v1438 = vmul.f32 %v1413, %v1017
        %v1439 = vmul.f32 %v1415, %v1017
        %v1440 = vmul.f32 %v1417, %v1017
        %v1441 = vmul.f32 %v1419, %v1017
        %v1442 = vmul.f32 %v1421, %v1017
        %v1443 = vmul.f32 %v1423, %v1017
        %v1444 = vmul.f32 %v1425, %v1017
        %v1445 = vmul.f32 %v1427, %v1017
        %v1446 = vmul.f32 %v1429, %v1017
        %v1447 = vmul.f32 %v1431, %v1017
        %v1448 = vsub.f32 %v1336, %v1432
        %v1449 = vsub.f32 %v1339, %v1433
        %v1450 = vsub.f32 %v1344, %v1434
        %v1451 = vsub.f32 %v1347, %v1435
        %v1452 = vsub.f32 %v1352, %v1436
        %v1453 = vsub.f32 %v1355, %v1437
        %v1454 = vsub.f32 %v1360, %v1438
        %v1455 = vsub.f32 %v1363, %v1439
        %v1456 = vsub.f32 %v1368, %v1440
        %v1457 = vsub.f32 %v1371, %v1441
        %v1458 = vsub.f32 %v1376, %v1442
        %v1459 = vsub.f32 %v1379, %v1443
        %v1460 = vsub.f32 %v1384, %v1444
        %v1461 = vsub.f32 %v1387, %v1445
        %v1462 = vsub.f32 %v1392, %v1446
        %v1463 = vsub.f32 %v1395, %v1447
        %v1464 = vmul.f32 %v1448, %v1448
        %v1465 = vmul.f32 %v1449, %v1449
        %v1466 = vmul.f32 %v1450, %v1450
        %v1467 = vmul.f32 %v1451, %v1451
        %v1468 = vmul.f32 %v1452, %v1452
        %v1469 = vmul.f32 %v1453, %v1453
        %v1470 = vmul.f32 %v1454, %v1454
        %v1471 = vmul.f32 %v1455, %v1455
        %v1472 = vmul.f32 %v1456, %v1456
        %v1473 = vmul.f32 %v1457, %v1457
        %v1474 = vmul.f32 %v1458, %v1458
        %v1475 = vmul.f32 %v1459, %v1459
        %v1476 = vmul.f32 %v1460, %v1460
        %v1477 = vmul.f32 %v1461, %v1461
        %v1478 = vmul.f32 %v1462, %v1462
        %v1479 = vmul.f32 %v1463, %v1463
        %1480 = vadd.xlane.f32.xlu0 %v1464
        %v1481 = vpop.xlane.xlu0 %1480
        %1482 = vadd.xlane.f32.xlu0 %v1465
        %v1483 = vpop.xlane.xlu0 %1482
        %1484 = vadd.xlane.f32.xlu0 %v1466
        %v1485 = vpop.xlane.xlu0 %1484
        %1486 = vadd.xlane.f32.xlu0 %v1467
        %v1487 = vpop.xlane.xlu0 %1486
        %1488 = vadd.xlane.f32.xlu0 %v1468
        %v1489 = vpop.xlane.xlu0 %1488
        %1490 = vadd.xlane.f32.xlu0 %v1469
        %v1491 = vpop.xlane.xlu0 %1490
        %1492 = vadd.xlane.f32.xlu0 %v1470
        %v1493 = vpop.xlane.xlu0 %1492
        %1494 = vadd.xlane.f32.xlu0 %v1471
        %v1495 = vpop.xlane.xlu0 %1494
        %1496 = vadd.xlane.f32.xlu0 %v1472
        %v1497 = vpop.xlane.xlu0 %1496
        %1498 = vadd.xlane.f32.xlu0 %v1473
        %v1499 = vpop.xlane.xlu0 %1498
        %1500 = vadd.xlane.f32.xlu0 %v1474
        %v1501 = vpop.xlane.xlu0 %1500
        %1502 = vadd.xlane.f32.xlu0 %v1475
        %v1503 = vpop.xlane.xlu0 %1502
        %1504 = vadd.xlane.f32.xlu0 %v1476
        %v1505 = vpop.xlane.xlu0 %1504
        %1506 = vadd.xlane.f32.xlu0 %v1477
        %v1507 = vpop.xlane.xlu0 %1506
        %1508 = vadd.xlane.f32.xlu0 %v1478
        %v1509 = vpop.xlane.xlu0 %1508
        %1510 = vadd.xlane.f32.xlu0 %v1479
        %v1511 = vpop.xlane.xlu0 %1510
        %v1512 = vmul.f32 %v1481, %v1017
        %v1513 = vmul.f32 %v1483, %v1017
        %v1514 = vmul.f32 %v1485, %v1017
        %v1515 = vmul.f32 %v1487, %v1017
        %v1516 = vmul.f32 %v1489, %v1017
        %v1517 = vmul.f32 %v1491, %v1017
        %v1518 = vmul.f32 %v1493, %v1017
        %v1519 = vmul.f32 %v1495, %v1017
        %v1520 = vmul.f32 %v1497, %v1017
        %v1521 = vmul.f32 %v1499, %v1017
        %v1522 = vmul.f32 %v1501, %v1017
        %v1523 = vmul.f32 %v1503, %v1017
        %v1524 = vmul.f32 %v1505, %v1017
        %v1525 = vmul.f32 %v1507, %v1017
        %v1526 = vmul.f32 %v1509, %v1017
        %v1527 = vmul.f32 %v1511, %v1017
        %v1528 = vadd.f32 %v1512, 1e-05
        %v1529 = vadd.f32 %v1513, 1e-05
        %v1530 = vadd.f32 %v1514, 1e-05
        %v1531 = vadd.f32 %v1515, 1e-05
        %v1532 = vadd.f32 %v1516, 1e-05
        %v1533 = vadd.f32 %v1517, 1e-05
        %v1534 = vadd.f32 %v1518, 1e-05
        %v1535 = vadd.f32 %v1519, 1e-05
        %v1536 = vadd.f32 %v1520, 1e-05
        %v1537 = vadd.f32 %v1521, 1e-05
        %v1538 = vadd.f32 %v1522, 1e-05
        %v1539 = vadd.f32 %v1523, 1e-05
        %v1540 = vadd.f32 %v1524, 1e-05
        %v1541 = vadd.f32 %v1525, 1e-05
        %v1542 = vadd.f32 %v1526, 1e-05
        %v1543 = vadd.f32 %v1527, 1e-05
        %v1544 = vrsqrt.pop %v1528
        %v1545 = vrsqrt.pop %v1529
        %v1546 = vrsqrt.pop %v1530
        %v1547 = vrsqrt.pop %v1531
        %v1548 = vrsqrt.pop %v1532
        %v1549 = vrsqrt.pop %v1533
        %v1550 = vrsqrt.pop %v1534
        %v1551 = vrsqrt.pop %v1535
        %v1552 = vrsqrt.pop %v1536
        %v1553 = vrsqrt.pop %v1537
        %v1554 = vrsqrt.pop %v1538
        %v1555 = vrsqrt.pop %v1539
        %v1556 = vrsqrt.pop %v1540
        %v1557 = vrsqrt.pop %v1541
        %v1558 = vrsqrt.pop %v1542
        %v1559 = vrsqrt.pop %v1543
        %v1560 = vmul.f32 %v1448, %v1544
        %v1561 = vmul.f32 %v1449, %v1545
        %v1562 = vmul.f32 %v1450, %v1546
        %v1563 = vmul.f32 %v1451, %v1547
        %v1564 = vmul.f32 %v1452, %v1548
        %v1565 = vmul.f32 %v1453, %v1549
        %v1566 = vmul.f32 %v1454, %v1550
        %v1567 = vmul.f32 %v1455, %v1551
        %v1568 = vmul.f32 %v1456, %v1552
        %v1569 = vmul.f32 %v1457, %v1553
        %v1570 = vmul.f32 %v1458, %v1554
        %v1571 = vmul.f32 %v1459, %v1555
        %v1572 = vmul.f32 %v1460, %v1556
        %v1573 = vmul.f32 %v1461, %v1557
        %v1574 = vmul.f32 %v1462, %v1558
        %v1575 = vmul.f32 %v1463, %v1559
        %v1577 = vlaneseq
        %v1578 = vshrl.u32 %v1577, 7
        %v1579 = vsub.s32 0, %v1578
        %v1580 = vrot.slane %v1398, %v1579
        %v1582 = vmul.f32 %v1560, %v1580
        %v1583 = vmul.f32 %v1561, %v1580
        %v1584 = vmul.f32 %v1562, %v1580
        %v1585 = vmul.f32 %v1563, %v1580
        %v1586 = vmul.f32 %v1564, %v1580
        %v1587 = vmul.f32 %v1565, %v1580
        %v1588 = vmul.f32 %v1566, %v1580
        %v1589 = vmul.f32 %v1567, %v1580
        %v1590 = vmul.f32 %v1568, %v1580
        %v1591 = vmul.f32 %v1569, %v1580
        %v1592 = vmul.f32 %v1570, %v1580
        %v1593 = vmul.f32 %v1571, %v1580
        %v1594 = vmul.f32 %v1572, %v1580
        %v1595 = vmul.f32 %v1573, %v1580
        %v1596 = vmul.f32 %v1574, %v1580
        %v1597 = vmul.f32 %v1575, %v1580
        %v1599 = vlaneseq
        %v1600 = vshrl.u32 %v1599, 7
        %v1601 = vsub.s32 0, %v1600
        %v1602 = vrot.slane %v1399, %v1601
        %v1604 = vadd.f32 %v1582, %v1602
        %v1605 = vadd.f32 %v1583, %v1602
        %v1606 = vadd.f32 %v1584, %v1602
        %v1607 = vadd.f32 %v1585, %v1602
        %v1608 = vadd.f32 %v1586, %v1602
        %v1609 = vadd.f32 %v1587, %v1602
        %v1610 = vadd.f32 %v1588, %v1602
        %v1611 = vadd.f32 %v1589, %v1602
        %v1612 = vadd.f32 %v1590, %v1602
        %v1613 = vadd.f32 %v1591, %v1602
        %v1614 = vadd.f32 %v1592, %v1602
        %v1615 = vadd.f32 %v1593, %v1602
        %v1616 = vadd.f32 %v1594, %v1602
        %v1617 = vadd.f32 %v1595, %v1602
        %v1618 = vadd.f32 %v1596, %v1602
        %v1619 = vadd.f32 %v1597, %v1602
        %v1620 = vmax.f32 %v1604, 0.0
        %v1621 = vmax.f32 %v1605, 0.0
        %v1622 = vmax.f32 %v1606, 0.0
        %v1623 = vmax.f32 %v1607, 0.0
        %v1624 = vmax.f32 %v1608, 0.0
        %v1625 = vmax.f32 %v1609, 0.0
        %v1626 = vmax.f32 %v1610, 0.0
        %v1627 = vmax.f32 %v1611, 0.0
        %v1628 = vmax.f32 %v1612, 0.0
        %v1629 = vmax.f32 %v1613, 0.0
        %v1630 = vmax.f32 %v1614, 0.0
        %v1631 = vmax.f32 %v1615, 0.0
        %v1632 = vmax.f32 %v1616, 0.0
        %v1633 = vmax.f32 %v1617, 0.0
        %v1634 = vmax.f32 %v1618, 0.0
        %v1635 = vmax.f32 %v1619, 0.0
        %v1636 = vpack.c.bf16 %v1621, %v1620
        %v1637 = vpack.c.bf16 %v1623, %v1622
        %v1638 = vpack.c.bf16 %v1625, %v1624
        %v1639 = vpack.c.bf16 %v1627, %v1626
        %v1640 = vpack.c.bf16 %v1629, %v1628
        %v1641 = vpack.c.bf16 %v1631, %v1630
        %v1642 = vpack.c.bf16 %v1633, %v1632
        %v1643 = vpack.c.bf16 %v1635, %v1634
        %v1644 = vld [vmem:[%s11] sm:$0xf]
        %v1645 = vld [vmem:[%s11 + $0x4] sm:$0xf]
        %v1646 = vld [vmem:[%s11 + $0x8] sm:$0xf]
        %v1647 = vld [vmem:[%s11 + $0xc] sm:$0xf]
        %v1648 = vld [vmem:[%s11 + $0x10] sm:$0xf]
        %v1649 = vld [vmem:[%s11 + $0x14] sm:$0xf]
        %v1650 = vld [vmem:[%s11 + $0x18] sm:$0xf]
        %v1651 = vld [vmem:[%s11 + $0x1c] sm:$0xf]
        %v1652 = vld [vmem:[%s11 + $0x20] sm:$0xf]
        %v1653 = vld [vmem:[%s11 + $0x24] sm:$0xf]
        %v1654 = vld [vmem:[%s11 + $0x28] sm:$0xf]
        %v1655 = vld [vmem:[%s11 + $0x2c] sm:$0xf]
        %v1656 = vld [vmem:[%s11 + $0x30] sm:$0xf]
        %v1657 = vld [vmem:[%s11 + $0x34] sm:$0xf]
        %v1658 = vld [vmem:[%s11 + $0x38] sm:$0xf]
        %v1659 = vld [vmem:[%s11 + $0x3c] sm:$0xf]
        %v1660 = vld [vmem:[%s12] sm:$0x1]
        %v1662 = vlaneseq
        %v1663 = vshrl.u32 %v1662, 7
        %v1664 = vsub.s32 0, %v1663
        %v1665 = vrot.slane %v1660, %v1664
        %v1683 = vunpack.c.l.b16 %v1644
        %v1684 = vunpack.c.l.b16 %v1645
        %v1685 = vunpack.c.l.b16 %v1646
        %v1686 = vunpack.c.l.b16 %v1647
        %v1687 = vunpack.c.l.b16 %v1648
        %v1688 = vunpack.c.l.b16 %v1649
        %v1689 = vunpack.c.l.b16 %v1650
        %v1690 = vunpack.c.l.b16 %v1651
        %v1691 = vunpack.c.l.b16 %v1652
        %v1692 = vunpack.c.l.b16 %v1653
        %v1693 = vunpack.c.l.b16 %v1654
        %v1694 = vunpack.c.l.b16 %v1655
        %v1695 = vunpack.c.l.b16 %v1656
        %v1696 = vunpack.c.l.b16 %v1657
        %v1697 = vunpack.c.l.b16 %v1658
        %v1698 = vunpack.c.l.b16 %v1659
        %v1699 = vpack.c.b16 %v1684, %v1683
        %v1700 = vpack.c.b16 %v1686, %v1685
        %v1701 = vpack.c.b16 %v1688, %v1687
        %v1702 = vpack.c.b16 %v1690, %v1689
        %v1703 = vpack.c.b16 %v1692, %v1691
        %v1704 = vpack.c.b16 %v1694, %v1693
        %v1705 = vpack.c.b16 %v1696, %v1695
        %v1706 = vpack.c.b16 %v1698, %v1697
        %1715 = vmatprep.subr.bf16.mxu0 0
        %1716 = vmatpush1.bf16.msra.mxu0 %v1706
        %1717 = vmatprep.subr.bf16.mxu0 0
        %1718 = vmatpush1.bf16.msra.mxu0 %v1705
        %1719 = vmatprep.subr.bf16.mxu0 0
        %1720 = vmatpush1.bf16.msra.mxu0 %v1704
        %1721 = vmatprep.subr.bf16.mxu0 0
        %1722 = vmatpush1.bf16.msra.mxu0 %v1703
        %1723 = vmatprep.subr.bf16.mxu0 0
        %1724 = vmatpush1.bf16.msra.mxu0 %v1702
        %1725 = vmatprep.subr.bf16.mxu0 0
        %1726 = vmatpush1.bf16.msra.mxu0 %v1701
        %1727 = vmatprep.subr.bf16.mxu0 0
        %1728 = vmatpush1.bf16.msra.mxu0 %v1700
        %1729 = vmatprep.subr.bf16.mxu0 0
        %1730 = vmatpush1.bf16.msra.mxu0 %v1699
        %1731 = vmatprep.subr.bf16.mxu0 0
        %1732 = vmatpush2.bf16.msra.mxu0 0
        %1733 = vmatprep.subr.bf16.mxu0 0
        %1734 = vmatpush2.bf16.msra.mxu0 0
        %1735 = vmatprep.subr.bf16.mxu0 0
        %1736 = vmatpush2.bf16.msra.mxu0 0
        %1737 = vmatprep.subr.bf16.mxu0 0
        %1738 = vmatpush2.bf16.msra.mxu0 0
        %1739 = vmatprep.subr.bf16.mxu0 0
        %1740 = vmatpush2.bf16.msra.mxu0 0
        %1741 = vmatprep.subr.bf16.mxu0 0
        %1742 = vmatpush2.bf16.msra.mxu0 0
        %1743 = vmatprep.subr.bf16.mxu0 0
        %1744 = vmatpush2.bf16.msra.mxu0 0
        %1745 = vmatprep.subr.bf16.mxu0 0
        %1746 = vmatpush2.bf16.msra.mxu0 0
        %1747 = vmatprep.mubr.bf16.mxu0 0
        %1748 = vmatmul.mubr.bf16.gmra.mxu0 %v1636
        %v1749 = vpop.f32.mrf.mxu0
        %v1750 = vadd.f32 %v1665, %v1749
        %v1751 = vpop.f32.mrf.mxu0
        %v1752 = vpop.f32.mrf.mxu0
        %v1753 = vadd.f32 %v1665, %v1752
        %v1754 = vpop.f32.mrf.mxu0
        %1755 = vmatprep.mubr.bf16.mxu0 0
        %1756 = vmatmul.mubr.bf16.gmra.mxu0 %v1637
        %v1757 = vpop.f32.mrf.mxu0
        %v1758 = vadd.f32 %v1665, %v1757
        %v1759 = vpop.f32.mrf.mxu0
        %v1760 = vpop.f32.mrf.mxu0
        %v1761 = vadd.f32 %v1665, %v1760
        %v1762 = vpop.f32.mrf.mxu0
        %1763 = vmatprep.mubr.bf16.mxu0 0
        %1764 = vmatmul.mubr.bf16.gmra.mxu0 %v1638
        %v1765 = vpop.f32.mrf.mxu0
        %v1766 = vadd.f32 %v1665, %v1765
        %v1767 = vpop.f32.mrf.mxu0
        %v1768 = vpop.f32.mrf.mxu0
        %v1769 = vadd.f32 %v1665, %v1768
        %v1770 = vpop.f32.mrf.mxu0
        %1771 = vmatprep.mubr.bf16.mxu0 0
        %1772 = vmatmul.mubr.bf16.gmra.mxu0 %v1639
        %v1773 = vpop.f32.mrf.mxu0
        %v1774 = vadd.f32 %v1665, %v1773
        %v1775 = vpop.f32.mrf.mxu0
        %v1776 = vpop.f32.mrf.mxu0
        %v1777 = vadd.f32 %v1665, %v1776
        %v1778 = vpop.f32.mrf.mxu0
        %1779 = vmatprep.mubr.bf16.mxu0 0
        %1780 = vmatmul.mubr.bf16.gmra.mxu0 %v1640
        %v1781 = vpop.f32.mrf.mxu0
        %v1782 = vadd.f32 %v1665, %v1781
        %v1783 = vpop.f32.mrf.mxu0
        %v1784 = vpop.f32.mrf.mxu0
        %v1785 = vadd.f32 %v1665, %v1784
        %v1786 = vpop.f32.mrf.mxu0
        %1787 = vmatprep.mubr.bf16.mxu0 0
        %1788 = vmatmul.mubr.bf16.gmra.mxu0 %v1641
        %v1789 = vpop.f32.mrf.mxu0
        %v1790 = vadd.f32 %v1665, %v1789
        %v1791 = vpop.f32.mrf.mxu0
        %v1792 = vpop.f32.mrf.mxu0
        %v1793 = vadd.f32 %v1665, %v1792
        %v1794 = vpop.f32.mrf.mxu0
        %1795 = vmatprep.mubr.bf16.mxu0 0
        %1796 = vmatmul.mubr.bf16.gmra.mxu0 %v1642
        %v1797 = vpop.f32.mrf.mxu0
        %v1798 = vadd.f32 %v1665, %v1797
        %v1799 = vpop.f32.mrf.mxu0
        %v1800 = vpop.f32.mrf.mxu0
        %v1801 = vadd.f32 %v1665, %v1800
        %v1802 = vpop.f32.mrf.mxu0
        %1803 = vmatprep.mubr.bf16.mxu0 0
        %1804 = vmatmul.mubr.bf16.gmra.mxu0 %v1643
        %v1805 = vpop.f32.mrf.mxu0
        %v1806 = vadd.f32 %v1665, %v1805
        %v1807 = vpop.f32.mrf.mxu0
        %v1808 = vpop.f32.mrf.mxu0
        %v1809 = vadd.f32 %v1665, %v1808
        %v1810 = vpop.f32.mrf.mxu0
        %1811 = vdwg.mxu0
        %1812 = vst [vmem:[%s446] sm:$0xff] %v1750
        %1813 = vst [vmem:[%s446 + $0x8] sm:$0xff] %v1753
        %1814 = vst [vmem:[%s446 + $0x10] sm:$0xff] %v1758
        %1815 = vst [vmem:[%s446 + $0x18] sm:$0xff] %v1761
        %1816 = vst [vmem:[%s446 + $0x20] sm:$0xff] %v1766
        %1817 = vst [vmem:[%s446 + $0x28] sm:$0xff] %v1769
        %1818 = vst [vmem:[%s446 + $0x30] sm:$0xff] %v1774
        %1819 = vst [vmem:[%s446 + $0x38] sm:$0xff] %v1777
        %1820 = vst [vmem:[%s446 + $0x40] sm:$0xff] %v1782
        %1821 = vst [vmem:[%s446 + $0x48] sm:$0xff] %v1785
        %1822 = vst [vmem:[%s446 + $0x50] sm:$0xff] %v1790
        %1823 = vst [vmem:[%s446 + $0x58] sm:$0xff] %v1793
        %1824 = vst [vmem:[%s446 + $0x60] sm:$0xff] %v1798
        %1825 = vst [vmem:[%s446 + $0x68] sm:$0xff] %v1801
        %1826 = vst [vmem:[%s446 + $0x70] sm:$0xff] %v1806
        %1827 = vst [vmem:[%s446 + $0x78] sm:$0xff] %v1809
      $region80: #{_edge_aggr_padded.1} parent=71 // pred_fallthru
        _
      %s1828 = smul.u32 16, %s28
      %p1829 = scmp.lt.s32.totalorder %s1828, 47
      %s1830 = scalar_select %p1829, %s1828, 47
      %s1831 = smul.addr %s1830, 8
      %s1832 = scalar_lea.vmem %s13, %s1831
      // Predicated region
      $region81: #{_edge_aggr_padded.1} parent=71 // pred_check
        %p1833 = pneg %p332
      $region82: #{_edge_aggr_padded.1} parent=71 // pred_check_branch
        %1835 = sbr.rel (%p1833) target = $region84
      $region83: #{_edge_aggr_padded.1} parent=71 // pred_region
        %s1836 = smul.u32 16, %s28
      $region84: #{_edge_aggr_padded.1} parent=71 // pred_fallthru
        _
    $region72: #{_edge_aggr_padded.1} parent=5 // pred_fallthru
      _
    %p1837 = scmp.le.s32.totalorder 2, %s19
    // Predicated region
    $region85: #{_edge_aggr_padded.1} parent=5 // pred_check
      %p1838 = pneg %p1837
    $region86: #{_edge_aggr_padded.1} parent=5 // pred_check_branch
      %1840 = sbr.rel (%p1838) target = $region88
    $region87: #{_edge_aggr_padded.1} parent=5 // pred_region
      %s1841 = ssub.s32 %s19, 2
      // Predicated region
      $region89: #{_edge_aggr_padded.1} parent=87 // pred_check
        %p1842 = pneg %p338
      $region90: #{_edge_aggr_padded.1} parent=87 // pred_check_branch
        %1844 = sbr.rel (%p1842) target = $region92
      $region91: #{_edge_aggr_padded.1} parent=87 // pred_region
        %s1845 = smul.u32 16, %s30
        %p1846 = scmp.lt.s32.totalorder %s1845, 47
        %s1847 = scalar_select %p1846, %s1845, 47
        %s1848 = smul.addr %s1847, 8
        %s1849 = scalar_lea.vmem %s13, %s1848
      $region92: #{_edge_aggr_padded.1} parent=87 // pred_fallthru
        _
    $region88: #{_edge_aggr_padded.1} parent=5 // pred_fallthru
      _
  $region6: #{_edge_aggr_padded.1} parent=0 // loop_footer
    %s23 = sadd.s32 1, %s19
  $region7: #{_edge_aggr_padded.1} parent=0 // loop_footer_branch
    %18 = sbr.rel target = $region3
  $region8: #{_edge_aggr_padded.1} parent=0 // loop_exit
    _

</llo_original>
